<compile_context>
chip_gen: v6e
topology: v6e:2x2x1
jax: 0.10.0
libtpu: 0.0.40
codegen_flags: <defaults>
</compile_context>

<pallas_src>
import functools
import numpy as np
import jax
import jax.numpy as jnp
from jax.experimental import pallas as pl
from jax.experimental.pallas import tpu as pltpu


def _round_up(x, m):
    return ((x + m - 1) // m) * m


# ----------------------------- Pallas kernels -----------------------------

def _l2norm_kernel(x_ref, o_ref):
    x = x_ref[...].astype(jnp.float32)
    # F.normalize(dim=-1): x / max(||x||, 1e-12) == x * rsqrt(max(||x||^2, 1e-24))
    inv = jax.lax.rsqrt(jnp.maximum(jnp.sum(x * x, axis=-1, keepdims=True), 1e-24))
    o_ref[...] = (x * inv).astype(o_ref.dtype)


def l2_normalize_rows(x, out_dtype=jnp.float32, tr=128):
    """Row-wise L2 normalization of a (M, C) array; M must be a multiple of tr."""
    M, C = x.shape
    assert M % tr == 0
    return pl.pallas_call(
        _l2norm_kernel,
        out_shape=jax.ShapeDtypeStruct((M, C), out_dtype),
        grid=(M // tr,),
        in_specs=[pl.BlockSpec((tr, C), lambda i: (i, 0))],
        out_specs=pl.BlockSpec((tr, C), lambda i: (i, 0)),
        compiler_params=pltpu.CompilerParams(dimension_semantics=("parallel",)),
    )(x)


def _correlation_kernel(img_ref, txt_ref, out_ref):
    # img_ref: (tm, C) image features; txt_ref: (C, TP_pad) pre-normalized text
    # (resident across grid steps).  out_ref: (tm, TP_pad) lane-dense cosine sims.
    img = img_ref[...].astype(jnp.float32)
    inv = jax.lax.rsqrt(jnp.maximum(jnp.sum(img * img, axis=-1, keepdims=True), 1e-24))
    img_n = (img * inv).astype(txt_ref.dtype)
    out_ref[...] = jnp.dot(img_n, txt_ref[...], preferred_element_type=jnp.float32)


def correlation(img, txt_t, tm):
    """img: (M, C) with M % tm == 0; txt_t: (C, TP_pad). Returns (M, TP_pad) f32."""
    M, C = img.shape
    TPp = txt_t.shape[1]
    assert M % tm == 0
    return pl.pallas_call(
        _correlation_kernel,
        out_shape=jax.ShapeDtypeStruct((M, TPp), jnp.float32),
        grid=(M // tm,),
        in_specs=[pl.BlockSpec((tm, C), lambda i: (i, 0)),
                  pl.BlockSpec((C, TPp), lambda i: (0, 0))],
        out_specs=pl.BlockSpec((tm, TPp), lambda i: (i, 0)),
        compiler_params=pltpu.CompilerParams(dimension_semantics=("parallel",)),
    )(img, txt_t)


def _embed_head_kernel(x_ref, a1_ref, b1_ref, a2_ref, bh_ref, o_ref):
    # x_ref : (bt_tile, HW*P)      per-(batch,class) flattened corr planes
    # a1_ref: (HW*P, HW*hid)       7x7 conv as a dense spatial matrix (resident)
    # b1_ref: (1, HW*hid)          conv1 bias tiled over output pixels
    # a2_ref: (HW*hid, 128)        3x3 head conv as a dense spatial matrix (padded)
    # bh_ref: (1, 1) in SMEM       head bias (scalar path)
    # o_ref : (bt_tile, 128)       lane-dense logits (first HW lanes valid)
    emb = jnp.dot(x_ref[...], a1_ref[...], preferred_element_type=jnp.float32)
    emb = emb + b1_ref[...]                       # (bt_tile, HW*hid), stays in VMEM
    logits = jnp.dot(emb.astype(a2_ref.dtype), a2_ref[...],
                     preferred_element_type=jnp.float32)
    o_ref[...] = logits + bh_ref[0, 0]


def embed_head(xi, a1, b1f, a2, bh, bt_tile):
    """xi: (N, HW*P) with N % bt_tile == 0 -> logits (N, 128) f32."""
    N, K1 = xi.shape
    N1 = a1.shape[1]
    N2 = a2.shape[1]
    assert N % bt_tile == 0 and a1.shape[0] == K1 and a2.shape[0] == N1
    return pl.pallas_call(
        _embed_head_kernel,
        out_shape=jax.ShapeDtypeStruct((N, N2), jnp.float32),
        grid=(N // bt_tile,),
        in_specs=[pl.BlockSpec((bt_tile, K1), lambda i: (i, 0)),
                  pl.BlockSpec((K1, N1), lambda i: (0, 0)),
                  pl.BlockSpec((1, N1), lambda i: (0, 0)),
                  pl.BlockSpec((N1, N2), lambda i: (0, 0)),
                  pl.BlockSpec(memory_space=pltpu.MemorySpace.SMEM)],
        out_specs=pl.BlockSpec((bt_tile, N2), lambda i: (i, 0)),
        compiler_params=pltpu.CompilerParams(dimension_semantics=("parallel",)),
    )(xi, a1, b1f, a2, bh)


# --------------------- weight preprocessing (JAX glue) ---------------------

def conv_to_dense(w, H, W):
    """Lower a stride-1, 'same'-zero-padded 2-D conv to a dense matrix.

    w: (Cout, Cin, kh, kw) (OIHW, cross-correlation as in torch/lax.conv).
    Returns D of shape (H*W*Cin, H*W*Cout) so that, with row-major spatial
    flattening, out[o*Cout + co] = sum_{i,ci} x[i*Cin + ci] * D[i*Cin+ci, o*Cout+co].
    Weight-sized preprocessing; spatial/tap bookkeeping is static numpy.
    """
    Cout, Cin, kh, kw = w.shape
    HW, KK = H * W, kh * kw
    ph, pw = kh // 2, kw // 2
    oy, ox = np.divmod(np.arange(HW), W)                       # (HW,)
    ky, kx = np.divmod(np.arange(KK), kw)                      # (KK,)
    iy = oy[:, None] + ky[None, :] - ph                        # (HW, KK)
    ix = ox[:, None] + kx[None, :] - pw
    valid = (iy >= 0) & (iy < H) & (ix >= 0) & (ix < W)
    ii = np.where(valid, iy * W + ix, 0)
    sel = np.zeros((HW, KK, HW), np.float32)                   # sel[o, k, i]
    sel[np.arange(HW)[:, None], np.arange(KK)[None, :], ii] = valid.astype(np.float32)
    wk = jnp.transpose(w, (2, 3, 1, 0)).reshape(KK, Cin, Cout)  # (KK, Cin, Cout)
    D = jnp.einsum("oki,kcd->icod", jnp.asarray(sel, w.dtype), wk,
                   precision=jax.lax.Precision.HIGHEST)         # (i, ci, o, co)
    return D.reshape(HW * Cin, HW * Cout)


def cat_seg_predictor_forward(x, text_features, params, mm_dtype=jnp.bfloat16):
    """
    x:             (B, C, H, W)  image features (NCHW, as in the PyTorch module)
    text_features: (T, P, C)     per-class / per-template text embeddings
    Returns segmentation logits (B, T, H, W).

    mm_dtype: operand dtype for all MXU matmuls (bf16 default -> wide MXU path
    on v5e/v6e/v7x); accumulation and all elementwise math stay float32.
    """
    B, C, H, W = x.shape
    T, P, _ = text_features.shape
    HW = H * W
    TP = T * P
    TP_pad = _round_up(TP, 128)

    # --- text: L2-normalize once (Pallas); no B-way broadcast in HBM ---
    txt = text_features.reshape(TP, C).astype(jnp.float32)
    txt = jnp.pad(txt, ((0, TP_pad - TP), (0, 0)))
    txt_n = l2_normalize_rows(txt, out_dtype=mm_dtype)           # (TP_pad, C)
    txt_t = txt_n.T                                              # (C, TP_pad), tiny

    # --- correlation: cosine sims as one (B*HW, C) @ (C, TP_pad) matmul ---
    img = x.reshape(B, C, HW).transpose(0, 2, 1).reshape(B * HW, C)
    M = B * HW
    tm = min(256, _round_up(M, 8))
    M_pad = _round_up(M, tm)
    if M_pad != M:
        img = jnp.pad(img, ((0, M_pad - M), (0, 0)))
    corr = correlation(img, txt_t, tm=tm)                        # (M_pad, TP_pad) f32

    # --- rearrange to per-(batch, class) flattened corr planes: (B*T, HW*P) ---
    # TODO(synk): tiny (B*T, HW*P) XLA transpose; could be folded into the
    # fused kernel's reads, but it is negligible at real scale.
    corr = corr[:M, :TP].reshape(B, HW, T, P)
    xi = corr.transpose(0, 2, 1, 3).reshape(B * T, HW * P).astype(mm_dtype)

    # --- conv weights as dense spatial matrices (weight-sized, once) ---
    w1, b1 = params["conv1_w"], params["conv1_b"]                # (hid,P,7,7),(hid,)
    wh, bh = params["head_w"], params["head_b"]                  # (1,hid,3,3),(1,)
    hid = w1.shape[0]
    a1 = conv_to_dense(w1, H, W).astype(mm_dtype)                # (HW*P, HW*hid)
    N2 = 128                                                     # lane-dense output
    a2 = conv_to_dense(wh, H, W)                                 # (HW*hid, HW)
    a2 = jnp.pad(a2, ((0, 0), (0, N2 - HW))).astype(mm_dtype)    # (HW*hid, 128)
    b1f = jnp.tile(b1.astype(jnp.float32), HW).reshape(1, HW * hid)
    bh_s = bh.astype(jnp.float32).reshape(1, 1)                  # SMEM scalar

    # --- fused corr_embed (7x7) + head (3x3), bt_tile elements per grid step ---
    Nbt = B * T
    bt_tile = min(128, _round_up(Nbt, 8))
    Nbt_pad = _round_up(Nbt, bt_tile)
    if Nbt_pad != Nbt:
        xi = jnp.pad(xi, ((0, Nbt_pad - Nbt), (0, 0)))
    logits = embed_head(xi, a1, b1f, a2, bh_s, bt_tile=bt_tile)  # (Nbt_pad, 128)

    return logits[:Nbt, :HW].reshape(B, T, H, W)


# ------------------------------- reference -------------------------------

def reference_forward(x, text_features, params):
    """Pure-JAX reference of the same computation (for validation)."""
    B, C, H, W = x.shape
    T, P, _ = text_features.shape
    imgn = x / jnp.maximum(jnp.sqrt(jnp.sum(x * x, axis=1, keepdims=True)), 1e-12)
    txtn = text_features / jnp.maximum(
        jnp.sqrt(jnp.sum(text_features * text_features, axis=-1, keepdims=True)), 1e-12)
    corr = jnp.einsum('bchw,tpc->bpthw', imgn, txtn,
                      precision=jax.lax.Precision.HIGHEST)
    corr_bt = corr.transpose(0, 2, 1, 3, 4).reshape(B * T, P, H, W)

    def conv(inp, w, b, pad):
        y = jax.lax.conv_general_dilated(
            inp, w, (1, 1), [(pad, pad), (pad, pad)],
            dimension_numbers=('NCHW', 'OIHW', 'NCHW'),
            precision=jax.lax.Precision.HIGHEST)
        return y + b[None, :, None, None]

    emb = conv(corr_bt, params["conv1_w"], params["conv1_b"], 3)
    logit = conv(emb, params["head_w"], params["head_b"], 1)
    return logit.reshape(B, T, H, W)


if __name__ == "__main__":
    key = jax.random.PRNGKey(0)
    # small shapes consistent with the module (real: x = (bz, 768, 7, 7),
    # 4 templates per class); H=W=7 exercises the real, non-aligned geometry.
    B, C, H, W = 2, 64, 7, 7
    T, P, hid = 5, 4, 32
    k_x, k_t, k_w1, k_b1, k_wh, k_bh = jax.random.split(key, 6)

    x = jax.random.normal(k_x, (B, C, H, W), jnp.float32)
    # TODO(synk): real text features come from the SILC/CLIP text encoder
    # checkpoint; synthesized deterministically here.
    text_features = jax.random.normal(k_t, (T, P, C), jnp.float32)

    params = {
        "conv1_w": jax.random.normal(k_w1, (hid, P, 7, 7), jnp.float32) * 0.05,
        "conv1_b": jax.random.normal(k_b1, (hid,), jnp.float32) * 0.05,
        "head_w": jax.random.normal(k_wh, (1, hid, 3, 3), jnp.float32) * 0.05,
        "head_b": jax.random.normal(k_bh, (1,), jnp.float32) * 0.05,
    }

    ref = jax.block_until_ready(reference_forward(x, text_features, params))

    # float32 MXU path: tight check against the reference.
    fwd_f32 = jax.jit(functools.partial(cat_seg_predictor_forward,
                                        mm_dtype=jnp.float32))
    out_f32 = jax.block_until_ready(fwd_f32(x, text_features, params))
    assert out_f32.shape == (B, T, H, W)
    np.testing.assert_allclose(np.asarray(out_f32), np.asarray(ref),
                               rtol=1e-2, atol=1e-2)

    # default bf16 MXU path (f32 accumulation): loose check.
    fwd_bf16 = jax.jit(cat_seg_predictor_forward)
    out_bf16 = jax.block_until_ready(fwd_bf16(x, text_features, params))
    assert out_bf16.shape == (B, T, H, W)
    assert bool(jnp.all(jnp.isfinite(out_bf16)))
    np.testing.assert_allclose(np.asarray(out_bf16), np.asarray(ref),
                               rtol=1e-1, atol=1e-1)

    print("KERNEL_OK")
</pallas_src>

<mosaic_0001>
module attributes {stable_mosaic.version = 11 : i64} {
  func.func @_l2norm_kernel(%arg0: i32, %arg1: memref<128x64xf32, #tpu.memory_space<vmem>>, %arg2: memref<128x64xf32, #tpu.memory_space<vmem>>) attributes {dimension_semantics = [#tpu.dimension_semantics<parallel>], iteration_bounds = array<i64: 1>, scalar_prefetch = 0 : i64, scratch_operands = 0 : i64, tpu.core_type = #tpu.core_type<tc>, window_params = [{transform_indices = @transform_0, window_bounds = array<i64: 128, 64>}, {transform_indices = @transform_1, window_bounds = array<i64: 128, 64>}]} {
    %c0 = arith.constant 0 : index
    %c0_0 = arith.constant 0 : index
    %0 = vector.load %arg1[%c0, %c0_0] : memref<128x64xf32, #tpu.memory_space<vmem>>, vector<128x64xf32>
    %1 = arith.mulf %0, %0 : vector<128x64xf32>
    %cst = arith.constant dense<0.000000e+00> : vector<128xf32>
    %2 = vector.multi_reduction <add>, %1, %cst [1] : vector<128x64xf32> to vector<128xf32>
    %3 = vector.shape_cast %2 : vector<128xf32> to vector<128x1xf32>
    %cst_1 = arith.constant 1.000000e-24 : f32
    %4 = vector.broadcast %cst_1 : f32 to vector<128x1xf32>
    %5 = arith.maximumf %3, %4 : vector<128x1xf32>
    %6 = math.rsqrt %5 : vector<128x1xf32>
    %7 = vector.broadcast %6 : vector<128x1xf32> to vector<128x64xf32>
    %8 = arith.mulf %0, %7 : vector<128x64xf32>
    %c0_2 = arith.constant 0 : index
    %c0_3 = arith.constant 0 : index
    %9 = vector.load %arg2[%c0_2, %c0_3] : memref<128x64xf32, #tpu.memory_space<vmem>>, vector<128x64xf32>
    tpu.vector_store %arg2[%c0_2, %c0_3], %8 {strides = array<i32>} : memref<128x64xf32, #tpu.memory_space<vmem>>, vector<128x64xf32>,
    return
  }
  func.func @transform_0(%arg0: i32) -> (i32, i32) {
    %c0_i32 = arith.constant 0 : i32
    %c0_i32_0 = arith.constant 0 : i32
    return %arg0, %c0_i32 : i32, i32
  }
  func.func @transform_1(%arg0: i32) -> (i32, i32) {
    %c0_i32 = arith.constant 0 : i32
    %c0_i32_0 = arith.constant 0 : i32
    return %arg0, %c0_i32 : i32, i32
  }
}

module attributes {stable_mosaic.version = 11 : i64} {
  func.func @_correlation_kernel(%arg0: i32, %arg1: memref<104x64xf32, #tpu.memory_space<vmem>>, %arg2: memref<64x128xf32, #tpu.memory_space<vmem>>, %arg3: memref<104x128xf32, #tpu.memory_space<vmem>>) attributes {dimension_semantics = [#tpu.dimension_semantics<parallel>], iteration_bounds = array<i64: 1>, scalar_prefetch = 0 : i64, scratch_operands = 0 : i64, tpu.core_type = #tpu.core_type<tc>, window_params = [{transform_indices = @transform_0, window_bounds = array<i64: 104, 64>}, {pipeline_mode = #tpu.pipeline_mode<synchronous>, transform_indices = @transform_1, window_bounds = array<i64: 64, 128>}, {transform_indices = @transform_2, window_bounds = array<i64: 104, 128>}]} {
    %c0 = arith.constant 0 : index
    %c0_0 = arith.constant 0 : index
    %0 = vector.load %arg1[%c0, %c0_0] : memref<104x64xf32, #tpu.memory_space<vmem>>, vector<104x64xf32>
    %1 = arith.mulf %0, %0 : vector<104x64xf32>
    %cst = arith.constant dense<0.000000e+00> : vector<104xf32>
    %2 = vector.multi_reduction <add>, %1, %cst [1] : vector<104x64xf32> to vector<104xf32>
    %3 = vector.shape_cast %2 : vector<104xf32> to vector<104x1xf32>
    %cst_1 = arith.constant 1.000000e-24 : f32
    %4 = vector.broadcast %cst_1 : f32 to vector<104x1xf32>
    %5 = arith.maximumf %3, %4 : vector<104x1xf32>
    %6 = math.rsqrt %5 : vector<104x1xf32>
    %7 = vector.broadcast %6 : vector<104x1xf32> to vector<104x64xf32>
    %8 = arith.mulf %0, %7 : vector<104x64xf32>
    %c0_2 = arith.constant 0 : index
    %c0_3 = arith.constant 0 : index
    %9 = vector.load %arg2[%c0_2, %c0_3] : memref<64x128xf32, #tpu.memory_space<vmem>>, vector<64x128xf32>
    %cst_4 = arith.constant dense<0.000000e+00> : vector<104x128xf32>
    %10 = tpu.matmul %8, %9, %cst_4 {dimension_numbers = #tpu.dot_dimension_numbers<[1], [0], [0], [1], [0, 0, 1, 1], [], []>} : vector<104x64xf32>, vector<64x128xf32>, vector<104x128xf32> -> vector<104x128xf32>
    %c0_5 = arith.constant 0 : index
    %c0_6 = arith.constant 0 : index
    %11 = vector.load %arg3[%c0_5, %c0_6] : memref<104x128xf32, #tpu.memory_space<vmem>>, vector<104x128xf32>
    tpu.vector_store %arg3[%c0_5, %c0_6], %10 {strides = array<i32>} : memref<104x128xf32, #tpu.memory_space<vmem>>, vector<104x128xf32>,
    return
  }
  func.func @transform_0(%arg0: i32) -> (i32, i32) {
    %c0_i32 = arith.constant 0 : i32
    %c0_i32_0 = arith.constant 0 : i32
    return %arg0, %c0_i32 : i32, i32
  }
  func.func @transform_1(%arg0: i32) -> (i32, i32) {
    %c0_i32 = arith.constant 0 : i32
    %c0_i32_0 = arith.constant 0 : i32
    %c0_i32_1 = arith.constant 0 : i32
    return %c0_i32, %c0_i32_0 : i32, i32
  }
  func.func @transform_2(%arg0: i32) -> (i32, i32) {
    %c0_i32 = arith.constant 0 : i32
    %c0_i32_0 = arith.constant 0 : i32
    return %arg0, %c0_i32 : i32, i32
  }
}

module attributes {stable_mosaic.version = 11 : i64} {
  func.func @_embed_head_kernel(%arg0: i32, %arg1: memref<16x196xf32, #tpu.memory_space<vmem>>, %arg2: memref<196x1568xf32, #tpu.memory_space<vmem>>, %arg3: memref<1x1568xf32, #tpu.memory_space<vmem>>, %arg4: memref<1568x128xf32, #tpu.memory_space<vmem>>, %arg5: memref<1x1xf32, #tpu.memory_space<smem>>, %arg6: memref<16x128xf32, #tpu.memory_space<vmem>>) attributes {dimension_semantics = [#tpu.dimension_semantics<parallel>], iteration_bounds = array<i64: 1>, scalar_prefetch = 0 : i64, scratch_operands = 0 : i64, tpu.core_type = #tpu.core_type<tc>, window_params = [{transform_indices = @transform_0, window_bounds = array<i64: 16, 196>}, {pipeline_mode = #tpu.pipeline_mode<synchronous>, transform_indices = @transform_1, window_bounds = array<i64: 196, 1568>}, {pipeline_mode = #tpu.pipeline_mode<synchronous>, transform_indices = @transform_2, window_bounds = array<i64: 1, 1568>}, {pipeline_mode = #tpu.pipeline_mode<synchronous>, transform_indices = @transform_3, window_bounds = array<i64: 1568, 128>}, {transform_indices = @transform_4, window_bounds = array<i64: 1, 1>}, {transform_indices = @transform_5, window_bounds = array<i64: 16, 128>}]} {
    %c0 = arith.constant 0 : index
    %c0_0 = arith.constant 0 : index
    %0 = vector.load %arg1[%c0, %c0_0] : memref<16x196xf32, #tpu.memory_space<vmem>>, vector<16x196xf32>
    %c0_1 = arith.constant 0 : index
    %c0_2 = arith.constant 0 : index
    %1 = vector.load %arg2[%c0_1, %c0_2] : memref<196x1568xf32, #tpu.memory_space<vmem>>, vector<196x1568xf32>
    %cst = arith.constant dense<0.000000e+00> : vector<16x1568xf32>
    %2 = tpu.matmul %0, %1, %cst {dimension_numbers = #tpu.dot_dimension_numbers<[1], [0], [0], [1], [0, 0, 1, 1], [], []>} : vector<16x196xf32>, vector<196x1568xf32>, vector<16x1568xf32> -> vector<16x1568xf32>
    %c0_3 = arith.constant 0 : index
    %c0_4 = arith.constant 0 : index
    %3 = vector.load %arg3[%c0_3, %c0_4] : memref<1x1568xf32, #tpu.memory_space<vmem>>, vector<1x1568xf32>
    %4 = vector.broadcast %3 : vector<1x1568xf32> to vector<16x1568xf32>
    %5 = arith.addf %2, %4 : vector<16x1568xf32>
    %c0_5 = arith.constant 0 : index
    %c0_6 = arith.constant 0 : index
    %6 = vector.load %arg4[%c0_5, %c0_6] : memref<1568x128xf32, #tpu.memory_space<vmem>>, vector<1568x128xf32>
    %cst_7 = arith.constant dense<0.000000e+00> : vector<16x128xf32>
    %7 = tpu.matmul %5, %6, %cst_7 {dimension_numbers = #tpu.dot_dimension_numbers<[1], [0], [0], [1], [0, 0, 1, 1], [], []>} : vector<16x1568xf32>, vector<1568x128xf32>, vector<16x128xf32> -> vector<16x128xf32>
    %c0_8 = arith.constant 0 : index
    %c0_9 = arith.constant 0 : index
    %8 = memref.load %arg5[%c0_8, %c0_9] : memref<1x1xf32, #tpu.memory_space<smem>>
    %9 = vector.broadcast %8 : f32 to vector<16x128xf32>
    %10 = arith.addf %7, %9 : vector<16x128xf32>
    %c0_10 = arith.constant 0 : index
    %c0_11 = arith.constant 0 : index
    %11 = vector.load %arg6[%c0_10, %c0_11] : memref<16x128xf32, #tpu.memory_space<vmem>>, vector<16x128xf32>
    tpu.vector_store %arg6[%c0_10, %c0_11], %10 {strides = array<i32>} : memref<16x128xf32, #tpu.memory_space<vmem>>, vector<16x128xf32>,
    return
  }
  func.func @transform_0(%arg0: i32) -> (i32, i32) {
    %c0_i32 = arith.constant 0 : i32
    %c0_i32_0 = arith.constant 0 : i32
    return %arg0, %c0_i32 : i32, i32
  }
  func.func @transform_1(%arg0: i32) -> (i32, i32) {
    %c0_i32 = arith.constant 0 : i32
    %c0_i32_0 = arith.constant 0 : i32
    %c0_i32_1 = arith.constant 0 : i32
    return %c0_i32, %c0_i32_0 : i32, i32
  }
  func.func @transform_2(%arg0: i32) -> (i32, i32) {
    %c0_i32 = arith.constant 0 : i32
    %c0_i32_0 = arith.constant 0 : i32
    %c0_i32_1 = arith.constant 0 : i32
    return %c0_i32, %c0_i32_0 : i32, i32
  }
  func.func @transform_3(%arg0: i32) -> (i32, i32) {
    %c0_i32 = arith.constant 0 : i32
    %c0_i32_0 = arith.constant 0 : i32
    %c0_i32_1 = arith.constant 0 : i32
    return %c0_i32, %c0_i32_0 : i32, i32
  }
  func.func @transform_4(%arg0: i32) -> (i32, i32) {
    %c0_i32 = arith.constant 0 : i32
    %c0_i32_0 = arith.constant 0 : i32
    %c0_i32_1 = arith.constant 0 : i32
    return %c0_i32, %c0_i32_0 : i32, i32
  }
  func.func @transform_5(%arg0: i32) -> (i32, i32) {
    %c0_i32 = arith.constant 0 : i32
    %c0_i32_0 = arith.constant 0 : i32
    return %arg0, %c0_i32 : i32, i32
  }
}

</mosaic_0001>

<llo_original>
// kernel: cat_seg_predictor_forward.3
$region0: #{cat_seg_predictor_forward.3}
  #allocation0 [shape = 'u32[]', space=smem, size = 0x4, offset = 0x4, fixed_abs, tag = 'smem constant byte address 0x4 - core index']
  #allocation1 [shape = 'u32[144,128]{1,0:T(1,128)}', space=vmem, size = 0x12000, scoped, tag = 'internal scratch']
  %s0 = inlined_call_operand.vmem [shape: f32[128,64], index: 0, kind: input, shape index: {}]
  %s1 = inlined_call_operand.vmem [shape: f32[128,64], index: 1, kind: output, shape index: {}]
  %s2 = sld [smem:[#allocation0]]
  $region14: #{cat_seg_predictor_forward.3} parent=0
    _
  %s4 = ssub.s32 1, %s2
  %s5 = scalar_select 0, %s4, %s2
  // Predicated region
  $region2: #{cat_seg_predictor_forward.3} parent=0 // pred_check
    _
  $region3: #{cat_seg_predictor_forward.3} parent=0 // pred_check_branch
    %7 = sbr.rel (0) target = $region5
  $region4: #{cat_seg_predictor_forward.3} parent=0 // pred_region
    _
  $region5: #{cat_seg_predictor_forward.3} parent=0 // pred_fallthru
    _
  %v8 = vld [vmem:[%s0] sm:$0xff]
  %v9 = vld [vmem:[%s0 + $0x8] sm:$0xff]
  %v10 = vld [vmem:[%s0 + $0x10] sm:$0xff]
  %v11 = vld [vmem:[%s0 + $0x18] sm:$0xff]
  %v12 = vld [vmem:[%s0 + $0x20] sm:$0xff]
  %v13 = vld [vmem:[%s0 + $0x28] sm:$0xff]
  %v14 = vld [vmem:[%s0 + $0x30] sm:$0xff]
  %v15 = vld [vmem:[%s0 + $0x38] sm:$0xff]
  %v16 = vld [vmem:[%s0 + $0x40] sm:$0xff]
  %v17 = vld [vmem:[%s0 + $0x48] sm:$0xff]
  %v18 = vld [vmem:[%s0 + $0x50] sm:$0xff]
  %v19 = vld [vmem:[%s0 + $0x58] sm:$0xff]
  %v20 = vld [vmem:[%s0 + $0x60] sm:$0xff]
  %v21 = vld [vmem:[%s0 + $0x68] sm:$0xff]
  %v22 = vld [vmem:[%s0 + $0x70] sm:$0xff]
  %v23 = vld [vmem:[%s0 + $0x78] sm:$0xff]
  %v24 = vmul.f32 %v8, %v8
  %v25 = vmul.f32 %v9, %v9
  %v26 = vmul.f32 %v10, %v10
  %v27 = vmul.f32 %v11, %v11
  %v28 = vmul.f32 %v12, %v12
  %v29 = vmul.f32 %v13, %v13
  %v30 = vmul.f32 %v14, %v14
  %v31 = vmul.f32 %v15, %v15
  %v32 = vmul.f32 %v16, %v16
  %v33 = vmul.f32 %v17, %v17
  %v34 = vmul.f32 %v18, %v18
  %v35 = vmul.f32 %v19, %v19
  %v36 = vmul.f32 %v20, %v20
  %v37 = vmul.f32 %v21, %v21
  %v38 = vmul.f32 %v22, %v22
  %v39 = vmul.f32 %v23, %v23
  %vm40 = vcmask 523264
  %v41 = vsel %vm40, %v24, 0.0
  %42 = vadd.xlane.f32.xlu0 %v41
  %v43 = vpop.xlane.xlu0 %42
  %v44 = vsel %vm40, %v25, 0.0
  %45 = vadd.xlane.f32.xlu0 %v44
  %v46 = vpop.xlane.xlu0 %45
  %v47 = vsel %vm40, %v26, 0.0
  %48 = vadd.xlane.f32.xlu0 %v47
  %v49 = vpop.xlane.xlu0 %48
  %v50 = vsel %vm40, %v27, 0.0
  %51 = vadd.xlane.f32.xlu0 %v50
  %v52 = vpop.xlane.xlu0 %51
  %v53 = vsel %vm40, %v28, 0.0
  %54 = vadd.xlane.f32.xlu0 %v53
  %v55 = vpop.xlane.xlu0 %54
  %v56 = vsel %vm40, %v29, 0.0
  %57 = vadd.xlane.f32.xlu0 %v56
  %v58 = vpop.xlane.xlu0 %57
  %v59 = vsel %vm40, %v30, 0.0
  %60 = vadd.xlane.f32.xlu0 %v59
  %v61 = vpop.xlane.xlu0 %60
  %v62 = vsel %vm40, %v31, 0.0
  %63 = vadd.xlane.f32.xlu0 %v62
  %v64 = vpop.xlane.xlu0 %63
  %v65 = vsel %vm40, %v32, 0.0
  %66 = vadd.xlane.f32.xlu0 %v65
  %v67 = vpop.xlane.xlu0 %66
  %v68 = vsel %vm40, %v33, 0.0
  %69 = vadd.xlane.f32.xlu0 %v68
  %v70 = vpop.xlane.xlu0 %69
  %v71 = vsel %vm40, %v34, 0.0
  %72 = vadd.xlane.f32.xlu0 %v71
  %v73 = vpop.xlane.xlu0 %72
  %v74 = vsel %vm40, %v35, 0.0
  %75 = vadd.xlane.f32.xlu0 %v74
  %v76 = vpop.xlane.xlu0 %75
  %v77 = vsel %vm40, %v36, 0.0
  %78 = vadd.xlane.f32.xlu0 %v77
  %v79 = vpop.xlane.xlu0 %78
  %v80 = vsel %vm40, %v37, 0.0
  %81 = vadd.xlane.f32.xlu0 %v80
  %v82 = vpop.xlane.xlu0 %81
  %v83 = vsel %vm40, %v38, 0.0
  %84 = vadd.xlane.f32.xlu0 %v83
  %v85 = vpop.xlane.xlu0 %84
  %v86 = vsel %vm40, %v39, 0.0
  %87 = vadd.xlane.f32.xlu0 %v86
  %v88 = vpop.xlane.xlu0 %87
  %v89 = vmax.f32 %v43, 1e-24
  %v90 = vmax.f32 %v46, 1e-24
  %v91 = vmax.f32 %v49, 1e-24
  %v92 = vmax.f32 %v52, 1e-24
  %v93 = vmax.f32 %v55, 1e-24
  %v94 = vmax.f32 %v58, 1e-24
  %v95 = vmax.f32 %v61, 1e-24
  %v96 = vmax.f32 %v64, 1e-24
  %v97 = vmax.f32 %v67, 1e-24
  %v98 = vmax.f32 %v70, 1e-24
  %v99 = vmax.f32 %v73, 1e-24
  %v100 = vmax.f32 %v76, 1e-24
  %v101 = vmax.f32 %v79, 1e-24
  %v102 = vmax.f32 %v82, 1e-24
  %v103 = vmax.f32 %v85, 1e-24
  %v104 = vmax.f32 %v88, 1e-24
  %v105 = vrsqrt.pop %v89
  %v106 = vrsqrt.pop %v90
  %v107 = vrsqrt.pop %v91
  %v108 = vrsqrt.pop %v92
  %v109 = vrsqrt.pop %v93
  %v110 = vrsqrt.pop %v94
  %v111 = vrsqrt.pop %v95
  %v112 = vrsqrt.pop %v96
  %v113 = vrsqrt.pop %v97
  %v114 = vrsqrt.pop %v98
  %v115 = vrsqrt.pop %v99
  %v116 = vrsqrt.pop %v100
  %v117 = vrsqrt.pop %v101
  %v118 = vrsqrt.pop %v102
  %v119 = vrsqrt.pop %v103
  %v120 = vrsqrt.pop %v104
  %v121 = vmul.f32 %v8, %v105
  %v122 = vmul.f32 %v9, %v106
  %v123 = vmul.f32 %v10, %v107
  %v124 = vmul.f32 %v11, %v108
  %v125 = vmul.f32 %v12, %v109
  %v126 = vmul.f32 %v13, %v110
  %v127 = vmul.f32 %v14, %v111
  %v128 = vmul.f32 %v15, %v112
  %v129 = vmul.f32 %v16, %v113
  %v130 = vmul.f32 %v17, %v114
  %v131 = vmul.f32 %v18, %v115
  %v132 = vmul.f32 %v19, %v116
  %v133 = vmul.f32 %v20, %v117
  %v134 = vmul.f32 %v21, %v118
  %v135 = vmul.f32 %v22, %v119
  %v136 = vmul.f32 %v23, %v120
  %137 = vst.msk [vmem:[%s1] sm:$0xff] %vm40, %v121
  %138 = vst.msk [vmem:[%s1 + $0x8] sm:$0xff] %vm40, %v122
  %139 = vst.msk [vmem:[%s1 + $0x10] sm:$0xff] %vm40, %v123
  %140 = vst.msk [vmem:[%s1 + $0x18] sm:$0xff] %vm40, %v124
  %141 = vst.msk [vmem:[%s1 + $0x20] sm:$0xff] %vm40, %v125
  %142 = vst.msk [vmem:[%s1 + $0x28] sm:$0xff] %vm40, %v126
  %143 = vst.msk [vmem:[%s1 + $0x30] sm:$0xff] %vm40, %v127
  %144 = vst.msk [vmem:[%s1 + $0x38] sm:$0xff] %vm40, %v128
  %145 = vst.msk [vmem:[%s1 + $0x40] sm:$0xff] %vm40, %v129
  %146 = vst.msk [vmem:[%s1 + $0x48] sm:$0xff] %vm40, %v130
  %147 = vst.msk [vmem:[%s1 + $0x50] sm:$0xff] %vm40, %v131
  %148 = vst.msk [vmem:[%s1 + $0x58] sm:$0xff] %vm40, %v132
  %149 = vst.msk [vmem:[%s1 + $0x60] sm:$0xff] %vm40, %v133
  %150 = vst.msk [vmem:[%s1 + $0x68] sm:$0xff] %vm40, %v134
  %151 = vst.msk [vmem:[%s1 + $0x70] sm:$0xff] %vm40, %v135
  %152 = vst.msk [vmem:[%s1 + $0x78] sm:$0xff] %vm40, %v136
  // Predicated region
  $region6: #{cat_seg_predictor_forward.3} parent=0 // pred_check
    _
  $region7: #{cat_seg_predictor_forward.3} parent=0 // pred_check_branch
    %154 = sbr.rel (0) target = $region9
  $region8: #{cat_seg_predictor_forward.3} parent=0 // pred_region
    _
  $region9: #{cat_seg_predictor_forward.3} parent=0 // pred_fallthru
    _
  // Predicated region
  $region10: #{cat_seg_predictor_forward.3} parent=0 // pred_check
    _
  $region11: #{cat_seg_predictor_forward.3} parent=0 // pred_check_branch
    %156 = sbr.rel (0) target = $region13
  $region12: #{cat_seg_predictor_forward.3} parent=0 // pred_region
    _
  $region13: #{cat_seg_predictor_forward.3} parent=0 // pred_fallthru
    _

// kernel: cat_seg_predictor_forward.4
$region0: #{cat_seg_predictor_forward.4}
  #allocation0 [shape = 'u32[]', space=smem, size = 0x4, offset = 0x4, fixed_abs, tag = 'smem constant byte address 0x4 - core index']
  #allocation1 [shape = 'u32[144,128]{1,0:T(1,128)}', space=vmem, size = 0x12000, scoped, tag = 'internal scratch']
  %s0 = inlined_call_operand.vmem [shape: f32[104,64], index: 0, kind: input, shape index: {}]
  %s1 = inlined_call_operand.vmem [shape: f32[64,128], index: 1, kind: input, shape index: {}]
  %s2 = inlined_call_operand.vmem [shape: f32[104,128], index: 2, kind: output, shape index: {}]
  %s3 = sld [smem:[#allocation0]]
  $region18: #{cat_seg_predictor_forward.4} parent=0
    _
  %s5 = ssub.s32 1, %s3
  %s6 = scalar_select 0, %s5, %s3
  // Predicated region
  $region2: #{cat_seg_predictor_forward.4} parent=0 // pred_check
    _
  $region3: #{cat_seg_predictor_forward.4} parent=0 // pred_check_branch
    %8 = sbr.rel (0) target = $region5
  $region4: #{cat_seg_predictor_forward.4} parent=0 // pred_region
    _
  $region5: #{cat_seg_predictor_forward.4} parent=0 // pred_fallthru
    _
  // Predicated region
  $region6: #{cat_seg_predictor_forward.4} parent=0 // pred_check
    _
  $region7: #{cat_seg_predictor_forward.4} parent=0 // pred_check_branch
    %10 = sbr.rel (0) target = $region9
  $region8: #{cat_seg_predictor_forward.4} parent=0 // pred_region
    _
  $region9: #{cat_seg_predictor_forward.4} parent=0 // pred_fallthru
    _
  %v11 = vld [vmem:[%s0] sm:$0xff]
  %v12 = vld [vmem:[%s0 + $0x8] sm:$0xff]
  %v13 = vld [vmem:[%s0 + $0x10] sm:$0xff]
  %v14 = vld [vmem:[%s0 + $0x18] sm:$0xff]
  %v15 = vld [vmem:[%s0 + $0x20] sm:$0xff]
  %v16 = vld [vmem:[%s0 + $0x28] sm:$0xff]
  %v17 = vld [vmem:[%s0 + $0x30] sm:$0xff]
  %v18 = vld [vmem:[%s0 + $0x38] sm:$0xff]
  %v19 = vld [vmem:[%s0 + $0x40] sm:$0xff]
  %v20 = vld [vmem:[%s0 + $0x48] sm:$0xff]
  %v21 = vld [vmem:[%s0 + $0x50] sm:$0xff]
  %v22 = vld [vmem:[%s0 + $0x58] sm:$0xff]
  %v23 = vld [vmem:[%s0 + $0x60] sm:$0xff]
  %v24 = vmul.f32 %v11, %v11
  %v25 = vmul.f32 %v12, %v12
  %v26 = vmul.f32 %v13, %v13
  %v27 = vmul.f32 %v14, %v14
  %v28 = vmul.f32 %v15, %v15
  %v29 = vmul.f32 %v16, %v16
  %v30 = vmul.f32 %v17, %v17
  %v31 = vmul.f32 %v18, %v18
  %v32 = vmul.f32 %v19, %v19
  %v33 = vmul.f32 %v20, %v20
  %v34 = vmul.f32 %v21, %v21
  %v35 = vmul.f32 %v22, %v22
  %v36 = vmul.f32 %v23, %v23
  %vm37 = vcmask 523264
  %v38 = vsel %vm37, %v24, 0.0
  %39 = vadd.xlane.f32.xlu0 %v38
  %v40 = vpop.xlane.xlu0 %39
  %v41 = vsel %vm37, %v25, 0.0
  %42 = vadd.xlane.f32.xlu0 %v41
  %v43 = vpop.xlane.xlu0 %42
  %v44 = vsel %vm37, %v26, 0.0
  %45 = vadd.xlane.f32.xlu0 %v44
  %v46 = vpop.xlane.xlu0 %45
  %v47 = vsel %vm37, %v27, 0.0
  %48 = vadd.xlane.f32.xlu0 %v47
  %v49 = vpop.xlane.xlu0 %48
  %v50 = vsel %vm37, %v28, 0.0
  %51 = vadd.xlane.f32.xlu0 %v50
  %v52 = vpop.xlane.xlu0 %51
  %v53 = vsel %vm37, %v29, 0.0
  %54 = vadd.xlane.f32.xlu0 %v53
  %v55 = vpop.xlane.xlu0 %54
  %v56 = vsel %vm37, %v30, 0.0
  %57 = vadd.xlane.f32.xlu0 %v56
  %v58 = vpop.xlane.xlu0 %57
  %v59 = vsel %vm37, %v31, 0.0
  %60 = vadd.xlane.f32.xlu0 %v59
  %v61 = vpop.xlane.xlu0 %60
  %v62 = vsel %vm37, %v32, 0.0
  %63 = vadd.xlane.f32.xlu0 %v62
  %v64 = vpop.xlane.xlu0 %63
  %v65 = vsel %vm37, %v33, 0.0
  %66 = vadd.xlane.f32.xlu0 %v65
  %v67 = vpop.xlane.xlu0 %66
  %v68 = vsel %vm37, %v34, 0.0
  %69 = vadd.xlane.f32.xlu0 %v68
  %v70 = vpop.xlane.xlu0 %69
  %v71 = vsel %vm37, %v35, 0.0
  %72 = vadd.xlane.f32.xlu0 %v71
  %v73 = vpop.xlane.xlu0 %72
  %v74 = vsel %vm37, %v36, 0.0
  %75 = vadd.xlane.f32.xlu0 %v74
  %v76 = vpop.xlane.xlu0 %75
  %v77 = vmax.f32 %v40, 1e-24
  %v78 = vmax.f32 %v43, 1e-24
  %v79 = vmax.f32 %v46, 1e-24
  %v80 = vmax.f32 %v49, 1e-24
  %v81 = vmax.f32 %v52, 1e-24
  %v82 = vmax.f32 %v55, 1e-24
  %v83 = vmax.f32 %v58, 1e-24
  %v84 = vmax.f32 %v61, 1e-24
  %v85 = vmax.f32 %v64, 1e-24
  %v86 = vmax.f32 %v67, 1e-24
  %v87 = vmax.f32 %v70, 1e-24
  %v88 = vmax.f32 %v73, 1e-24
  %v89 = vmax.f32 %v76, 1e-24
  %v90 = vrsqrt.pop %v77
  %v91 = vrsqrt.pop %v78
  %v92 = vrsqrt.pop %v79
  %v93 = vrsqrt.pop %v80
  %v94 = vrsqrt.pop %v81
  %v95 = vrsqrt.pop %v82
  %v96 = vrsqrt.pop %v83
  %v97 = vrsqrt.pop %v84
  %v98 = vrsqrt.pop %v85
  %v99 = vrsqrt.pop %v86
  %v100 = vrsqrt.pop %v87
  %v101 = vrsqrt.pop %v88
  %v102 = vrsqrt.pop %v89
  %v103 = vmul.f32 %v11, %v90
  %v104 = vmul.f32 %v12, %v91
  %v105 = vmul.f32 %v13, %v92
  %v106 = vmul.f32 %v14, %v93
  %v107 = vmul.f32 %v15, %v94
  %v108 = vmul.f32 %v16, %v95
  %v109 = vmul.f32 %v17, %v96
  %v110 = vmul.f32 %v18, %v97
  %v111 = vmul.f32 %v19, %v98
  %v112 = vmul.f32 %v20, %v99
  %v113 = vmul.f32 %v21, %v100
  %v114 = vmul.f32 %v22, %v101
  %v115 = vmul.f32 %v23, %v102
  %v116 = vld [vmem:[%s1] sm:$0xff]
  %v117 = vld [vmem:[%s1 + $0x8] sm:$0xff]
  %v118 = vld [vmem:[%s1 + $0x10] sm:$0xff]
  %v119 = vld [vmem:[%s1 + $0x18] sm:$0xff]
  %v120 = vld [vmem:[%s1 + $0x20] sm:$0xff]
  %v121 = vld [vmem:[%s1 + $0x28] sm:$0xff]
  %v122 = vld [vmem:[%s1 + $0x30] sm:$0xff]
  %v123 = vld [vmem:[%s1 + $0x38] sm:$0xff]
  %v125 = vsel %vm37, %v103, 0
  %v128 = vsel %vm37, %v104, 0
  %v131 = vsel %vm37, %v105, 0
  %v134 = vsel %vm37, %v106, 0
  %v137 = vsel %vm37, %v107, 0
  %v140 = vsel %vm37, %v108, 0
  %v143 = vsel %vm37, %v109, 0
  %v146 = vsel %vm37, %v110, 0
  %v149 = vsel %vm37, %v111, 0
  %v152 = vsel %vm37, %v112, 0
  %v155 = vsel %vm37, %v113, 0
  %v158 = vsel %vm37, %v114, 0
  %v161 = vsel %vm37, %v115, 0
  %163 = vmatprep.subr.mxu0 0.0
  %164 = vmatpush1.msra.mxu0 0.0
  %165 = vmatprep.subr.mxu0 0.0
  %166 = vmatpush1.msra.mxu0 0.0
  %167 = vmatprep.subr.mxu0 0.0
  %168 = vmatpush1.msra.mxu0 0.0
  %169 = vmatprep.subr.mxu0 0.0
  %170 = vmatpush1.msra.mxu0 0.0
  %171 = vmatprep.subr.mxu0 0.0
  %172 = vmatpush1.msra.mxu0 0.0
  %173 = vmatprep.subr.mxu0 0.0
  %174 = vmatpush1.msra.mxu0 0.0
  %175 = vmatprep.subr.mxu0 0.0
  %176 = vmatpush1.msra.mxu0 0.0
  %177 = vmatprep.subr.mxu0 0.0
  %178 = vmatpush1.msra.mxu0 0.0
  %179 = vmatprep.subr.mxu0 0.0
  %180 = vmatpush1.msra.mxu0 %v123
  %181 = vmatprep.subr.mxu0 0.0
  %182 = vmatpush1.msra.mxu0 %v122
  %183 = vmatprep.subr.mxu0 0.0
  %184 = vmatpush1.msra.mxu0 %v121
  %185 = vmatprep.subr.mxu0 0.0
  %186 = vmatpush1.msra.mxu0 %v120
  %187 = vmatprep.subr.mxu0 0.0
  %188 = vmatpush1.msra.mxu0 %v119
  %189 = vmatprep.subr.mxu0 0.0
  %190 = vmatpush1.msra.mxu0 %v118
  %191 = vmatprep.subr.mxu0 0.0
  %192 = vmatpush1.msra.mxu0 %v117
  %193 = vmatprep.subr.mxu0 0.0
  %194 = vmatpush1.msra.mxu0 %v116
  %195 = vmatprep.subr.mxu0 0.0
  %196 = vmatpush2.msra.mxu0 0.0
  %197 = vmatprep.subr.mxu0 0.0
  %198 = vmatpush2.msra.mxu0 0.0
  %199 = vmatprep.subr.mxu0 0.0
  %200 = vmatpush2.msra.mxu0 0.0
  %201 = vmatprep.subr.mxu0 0.0
  %202 = vmatpush2.msra.mxu0 0.0
  %203 = vmatprep.subr.mxu0 0.0
  %204 = vmatpush2.msra.mxu0 0.0
  %205 = vmatprep.subr.mxu0 0.0
  %206 = vmatpush2.msra.mxu0 0.0
  %207 = vmatprep.subr.mxu0 0.0
  %208 = vmatpush2.msra.mxu0 0.0
  %209 = vmatprep.subr.mxu0 0.0
  %210 = vmatpush2.msra.mxu0 0.0
  %211 = vmatprep.subr.mxu0 0.0
  %212 = vmatpush2.msra.mxu0 0.0
  %213 = vmatprep.subr.mxu0 0.0
  %214 = vmatpush2.msra.mxu0 0.0
  %215 = vmatprep.subr.mxu0 0.0
  %216 = vmatpush2.msra.mxu0 0.0
  %217 = vmatprep.subr.mxu0 0.0
  %218 = vmatpush2.msra.mxu0 0.0
  %219 = vmatprep.subr.mxu0 0.0
  %220 = vmatpush2.msra.mxu0 0.0
  %221 = vmatprep.subr.mxu0 0.0
  %222 = vmatpush2.msra.mxu0 0.0
  %223 = vmatprep.subr.mxu0 0.0
  %224 = vmatpush2.msra.mxu0 0.0
  %225 = vmatprep.subr.mxu0 0.0
  %226 = vmatpush2.msra.mxu0 0.0
  %227 = vmatprep.mubr.f32.mxu0 0.0
  %228 = vmatmul.mubr.f32.gmra.mxu0 %v125
  %v229 = vpop.f32.mrf.mxu0
  %v230 = vadd.f32 0.0, %v229
  %v231 = vpop.f32.mrf.mxu0
  %232 = vmatprep.mubr.f32.mxu0 0.0
  %233 = vmatmul.mubr.f32.gmra.mxu0 %v128
  %v234 = vpop.f32.mrf.mxu0
  %v235 = vadd.f32 0.0, %v234
  %v236 = vpop.f32.mrf.mxu0
  %237 = vmatprep.mubr.f32.mxu0 0.0
  %238 = vmatmul.mubr.f32.gmra.mxu0 %v131
  %v239 = vpop.f32.mrf.mxu0
  %v240 = vadd.f32 0.0, %v239
  %v241 = vpop.f32.mrf.mxu0
  %242 = vmatprep.mubr.f32.mxu0 0.0
  %243 = vmatmul.mubr.f32.gmra.mxu0 %v134
  %v244 = vpop.f32.mrf.mxu0
  %v245 = vadd.f32 0.0, %v244
  %v246 = vpop.f32.mrf.mxu0
  %247 = vmatprep.mubr.f32.mxu0 0.0
  %248 = vmatmul.mubr.f32.gmra.mxu0 %v137
  %v249 = vpop.f32.mrf.mxu0
  %v250 = vadd.f32 0.0, %v249
  %v251 = vpop.f32.mrf.mxu0
  %252 = vmatprep.mubr.f32.mxu0 0.0
  %253 = vmatmul.mubr.f32.gmra.mxu0 %v140
  %v254 = vpop.f32.mrf.mxu0
  %v255 = vadd.f32 0.0, %v254
  %v256 = vpop.f32.mrf.mxu0
  %257 = vmatprep.mubr.f32.mxu0 0.0
  %258 = vmatmul.mubr.f32.gmra.mxu0 %v143
  %v259 = vpop.f32.mrf.mxu0
  %v260 = vadd.f32 0.0, %v259
  %v261 = vpop.f32.mrf.mxu0
  %262 = vmatprep.mubr.f32.mxu0 0.0
  %263 = vmatmul.mubr.f32.gmra.mxu0 %v146
  %v264 = vpop.f32.mrf.mxu0
  %v265 = vadd.f32 0.0, %v264
  %v266 = vpop.f32.mrf.mxu0
  %267 = vmatprep.mubr.f32.mxu0 0.0
  %268 = vmatmul.mubr.f32.gmra.mxu0 %v149
  %v269 = vpop.f32.mrf.mxu0
  %v270 = vadd.f32 0.0, %v269
  %v271 = vpop.f32.mrf.mxu0
  %272 = vmatprep.mubr.f32.mxu0 0.0
  %273 = vmatmul.mubr.f32.gmra.mxu0 %v152
  %v274 = vpop.f32.mrf.mxu0
  %v275 = vadd.f32 0.0, %v274
  %v276 = vpop.f32.mrf.mxu0
  %277 = vmatprep.mubr.f32.mxu0 0.0
  %278 = vmatmul.mubr.f32.gmra.mxu0 %v155
  %v279 = vpop.f32.mrf.mxu0
  %v280 = vadd.f32 0.0, %v279
  %v281 = vpop.f32.mrf.mxu0
  %282 = vmatprep.mubr.f32.mxu0 0.0
  %283 = vmatmul.mubr.f32.gmra.mxu0 %v158
  %v284 = vpop.f32.mrf.mxu0
  %v285 = vadd.f32 0.0, %v284
  %v286 = vpop.f32.mrf.mxu0
  %287 = vmatprep.mubr.f32.mxu0 0.0
  %288 = vmatmul.mubr.f32.gmra.mxu0 %v161
  %v289 = vpop.f32.mrf.mxu0
  %v290 = vadd.f32 0.0, %v289
  %v291 = vpop.f32.mrf.mxu0
  %292 = vdwg.mxu0
  %293 = vst [vmem:[%s2] sm:$0xff] %v230
  %294 = vst [vmem:[%s2 + $0x8] sm:$0xff] %v235
  %295 = vst [vmem:[%s2 + $0x10] sm:$0xff] %v240
  %296 = vst [vmem:[%s2 + $0x18] sm:$0xff] %v245
  %297 = vst [vmem:[%s2 + $0x20] sm:$0xff] %v250
  %298 = vst [vmem:[%s2 + $0x28] sm:$0xff] %v255
  %299 = vst [vmem:[%s2 + $0x30] sm:$0xff] %v260
  %300 = vst [vmem:[%s2 + $0x38] sm:$0xff] %v265
  %301 = vst [vmem:[%s2 + $0x40] sm:$0xff] %v270
  %302 = vst [vmem:[%s2 + $0x48] sm:$0xff] %v275
  %303 = vst [vmem:[%s2 + $0x50] sm:$0xff] %v280
  %304 = vst [vmem:[%s2 + $0x58] sm:$0xff] %v285
  %305 = vst [vmem:[%s2 + $0x60] sm:$0xff] %v290
  // Predicated region
  $region10: #{cat_seg_predictor_forward.4} parent=0 // pred_check
    _
  $region11: #{cat_seg_predictor_forward.4} parent=0 // pred_check_branch
    %307 = sbr.rel (0) target = $region13
  $region12: #{cat_seg_predictor_forward.4} parent=0 // pred_region
    _
  $region13: #{cat_seg_predictor_forward.4} parent=0 // pred_fallthru
    _
  // Predicated region
  $region14: #{cat_seg_predictor_forward.4} parent=0 // pred_check
    _
  $region15: #{cat_seg_predictor_forward.4} parent=0 // pred_check_branch
    %309 = sbr.rel (0) target = $region17
  $region16: #{cat_seg_predictor_forward.4} parent=0 // pred_region
    _
  $region17: #{cat_seg_predictor_forward.4} parent=0 // pred_fallthru
    _

// kernel: tile.8
$region0: #{tile.8}
  #allocation0 [shape = 's32[1]{0}', space=sflag, size = 0x4, scoped, tag = 'scoped memory for tile.8']
  %s0 = inlined_call_operand.vmem [shape: f32[32], index: 0, kind: input, shape index: {}]
  %s1 = inlined_call_operand.vmem [shape: f32[49,32], index: 1, kind: output, shape index: {}]
  // Predicated region
  $region2: #{tile.8} parent=0 // pred_check
    _
  $region3: #{tile.8} parent=0 // pred_check_branch
    %3 = sbr.rel (0) target = $region5
  $region4: #{tile.8} parent=0 // pred_region
    _
  $region5: #{tile.8} parent=0 // pred_fallthru
    _
  %v4 = vld [vmem:[%s0] ss:$0 sm:$0xff]
  %5 = vst [vmem:[%s1] sm:$0xff] %v4
  %s6 = scalar_lea.vmem %s1, 8
  %7 = vst [vmem:[%s6] sm:$0xff] %v4
  %s8 = scalar_lea.vmem %s1, 16
  %9 = vst [vmem:[%s8] sm:$0xff] %v4
  %s10 = scalar_lea.vmem %s1, 24
  %11 = vst [vmem:[%s10] sm:$0xff] %v4
  %s12 = scalar_lea.vmem %s1, 32
  %13 = vst [vmem:[%s12] sm:$0xff] %v4
  %s14 = scalar_lea.vmem %s1, 40
  %15 = vst [vmem:[%s14] sm:$0xff] %v4
  %s16 = scalar_lea.vmem %s1, 48
  %17 = vst [vmem:[%s16] sm:$0xff] %v4

// kernel: tile.9
$region0: #{tile.9}
  %s0 = inlined_call_operand.vmem [shape: f32[49,32], index: 0, kind: input, shape index: {}]
  %s1 = inlined_call_operand.vmem [shape: f32[1,1568], index: 1, kind: output, shape index: {}]
  $region1: #{tile.9} parent=0
    #allocation0 [shape = 'u8[53248]{0}', space=vmem, size = 0xd000, scoped, tag = 'scoped mem for output reshape']
    %v2 = vld [vmem:[%s0] ss:$4 sm:$0xff]
    %vm3 = vcmask 261120
    %4 = vst.msk [vmem:[#allocation0] ss:$8 sm:$0xf] %vm3, %v2
    %5 = vst.msk [vmem:[#allocation0] ss:$8 sm:$0xf0] %vm3, %v2
    %s6 = scalar_lea.vmem %s0, 32
    %v7 = vld [vmem:[%s6] ss:$4 sm:$0x1f]
    %vm8 = vcmask 261120
    %s9 = scalar_lea.vmem [#allocation0], 64
    %10 = vst.msk [vmem:[%s9] ss:$8 sm:$0xf] %vm8, %v7
    %s11 = scalar_lea.vmem [#allocation0], 92
    %12 = vst.msk [vmem:[%s11] sm:$0x10] %vm8, %v7
    %s13 = scalar_lea.vmem %s0, 3
    %v14 = vld [vmem:[%s13] ss:$4 sm:$0xff]
    %15 = vrot.lane.b32.xlu0 %v14, 96
    %v16 = vpop.permute.xlu0 %15
    %vm17 = vcmask 1048320
    %18 = vst.msk [vmem:[#allocation0] ss:$8 sm:$0xf] %vm17, %v16
    %19 = vst.msk [vmem:[#allocation0] ss:$8 sm:$0xf0] %vm17, %v16
    %s20 = scalar_lea.vmem %s0, 35
    %v21 = vld [vmem:[%s20] ss:$4 sm:$0xf]
    %22 = vrot.lane.b32.xlu0 %v21, 96
    %v23 = vpop.permute.xlu0 %22
    %vm24 = vcmask 1048320
    %s25 = scalar_lea.vmem [#allocation0], 64
    %26 = vst.msk [vmem:[%s25] ss:$8 sm:$0xf] %vm24, %v23
    %s27 = scalar_lea.vmem %s0, 2
    %v28 = vld [vmem:[%s27] ss:$4 sm:$0xff]
    %29 = vrot.lane.b32.xlu0 %v28, 64
    %v30 = vpop.permute.xlu0 %29
    %vm31 = vcmask 785920
    %32 = vst.msk [vmem:[#allocation0] ss:$8 sm:$0xf] %vm31, %v30
    %33 = vst.msk [vmem:[#allocation0] ss:$8 sm:$0xf0] %vm31, %v30
    %s34 = scalar_lea.vmem %s0, 34
    %v35 = vld [vmem:[%s34] ss:$4 sm:$0xf]
    %36 = vrot.lane.b32.xlu0 %v35, 64
    %v37 = vpop.permute.xlu0 %36
    %vm38 = vcmask 785920
    %s39 = scalar_lea.vmem [#allocation0], 64
    %40 = vst.msk [vmem:[%s39] ss:$8 sm:$0xf] %vm38, %v37
    %s41 = scalar_lea.vmem %s0, 1
    %v42 = vld [vmem:[%s41] ss:$4 sm:$0xff]
    %43 = vrot.lane.b32.xlu0 %v42, 32
    %v44 = vpop.permute.xlu0 %43
    %vm45 = vcmask 523520
    %46 = vst.msk [vmem:[#allocation0] ss:$8 sm:$0xf] %vm45, %v44
    %47 = vst.msk [vmem:[#allocation0] ss:$8 sm:$0xf0] %vm45, %v44
    %s48 = scalar_lea.vmem %s0, 33
    %v49 = vld [vmem:[%s48] ss:$4 sm:$0xf]
    %50 = vrot.lane.b32.xlu0 %v49, 32
    %v51 = vpop.permute.xlu0 %50
    %vm52 = vcmask 523520
    %s53 = scalar_lea.vmem [#allocation0], 64
    %54 = vst.msk [vmem:[%s53] ss:$8 sm:$0xf] %vm52, %v51
    %s56 = sshll.u32 1, 1
    %s57 = ssub.s32 %s56, 1
    %v59 = vld [vmem:[#allocation0] sm:%s57]
    %s60 = sshll.u32 1, 1
    %s61 = ssub.s32 %s60, 1
    %62 = vst [vmem:[%s1] sm:%s61] %v59
    %s63 = scalar_lea.vmem [#allocation0], 8
    %v64 = vld [vmem:[%s63] sm:%s57]
    %s65 = sshll.u32 1, 1
    %s66 = ssub.s32 %s65, 1
    %s67 = scalar_lea.vmem %s1, 1
    %68 = vst [vmem:[%s67] sm:%s66] %v64
    %s69 = scalar_lea.vmem [#allocation0], 16
    %v70 = vld [vmem:[%s69] sm:%s57]
    %s71 = sshll.u32 1, 1
    %s72 = ssub.s32 %s71, 1
    %s73 = smul.addr 1, 2
    %s74 = scalar_lea.vmem %s1, %s73
    %75 = vst [vmem:[%s74] sm:%s72] %v70
    %s76 = scalar_lea.vmem [#allocation0], 24
    %v77 = vld [vmem:[%s76] sm:%s57]
    %s78 = sshll.u32 1, 1
    %s79 = ssub.s32 %s78, 1
    %s80 = smul.addr 1, 3
    %s81 = scalar_lea.vmem %s1, %s80
    %82 = vst [vmem:[%s81] sm:%s79] %v77
    %s83 = scalar_lea.vmem [#allocation0], 32
    %v84 = vld [vmem:[%s83] sm:%s57]
    %s85 = sshll.u32 1, 1
    %s86 = ssub.s32 %s85, 1
    %s87 = smul.addr 1, 4
    %s88 = scalar_lea.vmem %s1, %s87
    %89 = vst [vmem:[%s88] sm:%s86] %v84
    %s90 = scalar_lea.vmem [#allocation0], 40
    %v91 = vld [vmem:[%s90] sm:%s57]
    %s92 = sshll.u32 1, 1
    %s93 = ssub.s32 %s92, 1
    %s94 = smul.addr 1, 5
    %s95 = scalar_lea.vmem %s1, %s94
    %96 = vst [vmem:[%s95] sm:%s93] %v91
    %s97 = scalar_lea.vmem [#allocation0], 48
    %v98 = vld [vmem:[%s97] sm:%s57]
    %s99 = sshll.u32 1, 1
    %s100 = ssub.s32 %s99, 1
    %s101 = smul.addr 1, 6
    %s102 = scalar_lea.vmem %s1, %s101
    %103 = vst [vmem:[%s102] sm:%s100] %v98
    %s104 = scalar_lea.vmem [#allocation0], 56
    %v105 = vld [vmem:[%s104] sm:%s57]
    %s106 = sshll.u32 1, 1
    %s107 = ssub.s32 %s106, 1
    %s108 = smul.addr 1, 7
    %s109 = scalar_lea.vmem %s1, %s108
    %110 = vst [vmem:[%s109] sm:%s107] %v105
    %s111 = scalar_lea.vmem [#allocation0], 64
    %v112 = vld [vmem:[%s111] sm:%s57]
    %s113 = sshll.u32 1, 1
    %s114 = ssub.s32 %s113, 1
    %s115 = smul.addr 1, 8
    %s116 = scalar_lea.vmem %s1, %s115
    %117 = vst [vmem:[%s116] sm:%s114] %v112
    %s118 = scalar_lea.vmem [#allocation0], 72
    %v119 = vld [vmem:[%s118] sm:%s57]
    %s120 = sshll.u32 1, 1
    %s121 = ssub.s32 %s120, 1
    %s122 = smul.addr 1, 9
    %s123 = scalar_lea.vmem %s1, %s122
    %124 = vst [vmem:[%s123] sm:%s121] %v119
    %s125 = scalar_lea.vmem [#allocation0], 80
    %v126 = vld [vmem:[%s125] sm:%s57]
    %s127 = sshll.u32 1, 1
    %s128 = ssub.s32 %s127, 1
    %s129 = smul.addr 1, 10
    %s130 = scalar_lea.vmem %s1, %s129
    %131 = vst [vmem:[%s130] sm:%s128] %v126
    %s132 = scalar_lea.vmem [#allocation0], 88
    %v133 = vld [vmem:[%s132] sm:%s57]
    %s134 = sshll.u32 1, 1
    %s135 = ssub.s32 %s134, 1
    %s136 = smul.addr 1, 11
    %s137 = scalar_lea.vmem %s1, %s136
    %138 = vst [vmem:[%s137] sm:%s135] %v133
    %s139 = scalar_lea.vmem [#allocation0], 96
    %v140 = vld [vmem:[%s139] sm:%s57]
    %s141 = sshll.u32 1, 1
    %s142 = ssub.s32 %s141, 1
    %s143 = smul.addr 1, 12
    %s144 = scalar_lea.vmem %s1, %s143
    %145 = vst [vmem:[%s144] sm:%s142] %v140

// kernel: cat_seg_predictor_forward.5
$region0: #{cat_seg_predictor_forward.5}
  #allocation0 [shape = 'u32[]', space=smem, size = 0x4, offset = 0x4, fixed_abs, tag = 'smem constant byte address 0x4 - core index']
  #allocation1 [shape = 'u32[144,128]{1,0:T(1,128)}', space=vmem, size = 0x12000, scoped, tag = 'internal scratch']
  #allocation2 [shape = 'f32[1,1]{1,0:T(1,128)S(6)}', space=smem, size = 0x200, scoped, tag = 'scoped memory for cat_seg_predictor_forward.5']
  %s0 = inlined_call_operand.vmem [shape: f32[16,196], index: 0, kind: input, shape index: {}]
  %s1 = inlined_call_operand.vmem [shape: f32[196,1568], index: 1, kind: input, shape index: {}]
  %s2 = inlined_call_operand.vmem [shape: f32[1,1568], index: 2, kind: input, shape index: {}]
  %s3 = inlined_call_operand.vmem [shape: f32[1568,128], index: 3, kind: input, shape index: {}]
  %s4 = inlined_call_operand.<no memory space> [shape: f32[1,1], index: 4, kind: input, shape index: {}]
  %s5 = inlined_call_operand.vmem [shape: f32[16,128], index: 5, kind: output, shape index: {}]
  %s6 = sld [smem:[#allocation0]]
  $region30: #{cat_seg_predictor_forward.5} parent=0
    _
  %s8 = ssub.s32 1, %s6
  %s9 = scalar_select 0, %s8, %s6
  %10 = sst [smem:[#allocation2]] %s4
  // Predicated region
  $region2: #{cat_seg_predictor_forward.5} parent=0 // pred_check
    _
  $region3: #{cat_seg_predictor_forward.5} parent=0 // pred_check_branch
    %12 = sbr.rel (0) target = $region5
  $region4: #{cat_seg_predictor_forward.5} parent=0 // pred_region
    _
  $region5: #{cat_seg_predictor_forward.5} parent=0 // pred_fallthru
    _
  // Predicated region
  $region6: #{cat_seg_predictor_forward.5} parent=0 // pred_check
    _
  $region7: #{cat_seg_predictor_forward.5} parent=0 // pred_check_branch
    %14 = sbr.rel (0) target = $region9
  $region8: #{cat_seg_predictor_forward.5} parent=0 // pred_region
    _
  $region9: #{cat_seg_predictor_forward.5} parent=0 // pred_fallthru
    _
  // Predicated region
  $region10: #{cat_seg_predictor_forward.5} parent=0 // pred_check
    _
  $region11: #{cat_seg_predictor_forward.5} parent=0 // pred_check_branch
    %16 = sbr.rel (0) target = $region13
  $region12: #{cat_seg_predictor_forward.5} parent=0 // pred_region
    _
  $region13: #{cat_seg_predictor_forward.5} parent=0 // pred_fallthru
    _
  // Predicated region
  $region14: #{cat_seg_predictor_forward.5} parent=0 // pred_check
    _
  $region15: #{cat_seg_predictor_forward.5} parent=0 // pred_check_branch
    %18 = sbr.rel (0) target = $region17
  $region16: #{cat_seg_predictor_forward.5} parent=0 // pred_region
    _
  $region17: #{cat_seg_predictor_forward.5} parent=0 // pred_fallthru
    _
  // Predicated region
  $region18: #{cat_seg_predictor_forward.5} parent=0 // pred_check
    _
  $region19: #{cat_seg_predictor_forward.5} parent=0 // pred_check_branch
    %20 = sbr.rel (0) target = $region21
  $region20: #{cat_seg_predictor_forward.5} parent=0 // pred_region
    _
  $region21: #{cat_seg_predictor_forward.5} parent=0 // pred_fallthru
    _
  %v21 = vld [vmem:[%s0] sm:$0xff]
  %v22 = vld [vmem:[%s0 + $0x8] sm:$0xff]
  %v23 = vld [vmem:[%s0 + $0x10] sm:$0xff]
  %v24 = vld [vmem:[%s0 + $0x18] sm:$0xff]
  %v25 = vld [vmem:[%s1] sm:$0xff]
  %v26 = vld [vmem:[%s1 + $0x8] sm:$0xff]
  %v27 = vld [vmem:[%s1 + $0x10] sm:$0xff]
  %v28 = vld [vmem:[%s1 + $0x18] sm:$0xff]
  %v29 = vld [vmem:[%s1 + $0x20] sm:$0xff]
  %v30 = vld [vmem:[%s1 + $0x28] sm:$0xff]
  %v31 = vld [vmem:[%s1 + $0x30] sm:$0xff]
  %v32 = vld [vmem:[%s1 + $0x38] sm:$0xff]
  %v33 = vld [vmem:[%s1 + $0x40] sm:$0xff]
  %v34 = vld [vmem:[%s1 + $0x48] sm:$0xff]
  %v35 = vld [vmem:[%s1 + $0x50] sm:$0xff]
  %v36 = vld [vmem:[%s1 + $0x58] sm:$0xff]
  %v37 = vld [vmem:[%s1 + $0x60] sm:$0xff]
  %v38 = vld [vmem:[%s1 + $0x68] sm:$0xff]
  %v39 = vld [vmem:[%s1 + $0x70] sm:$0xff]
  %v40 = vld [vmem:[%s1 + $0x78] sm:$0xff]
  %v41 = vld [vmem:[%s1 + $0x80] sm:$0xff]
  %v42 = vld [vmem:[%s1 + $0x88] sm:$0xff]
  %v43 = vld [vmem:[%s1 + $0x90] sm:$0xff]
  %v44 = vld [vmem:[%s1 + $0x98] sm:$0xff]
  %v45 = vld [vmem:[%s1 + $0xa0] sm:$0xff]
  %v46 = vld [vmem:[%s1 + $0xa8] sm:$0xff]
  %v47 = vld [vmem:[%s1 + $0xb0] sm:$0xff]
  %v48 = vld [vmem:[%s1 + $0xb8] sm:$0xff]
  %v49 = vld [vmem:[%s1 + $0xc0] sm:$0xff]
  %v50 = vld [vmem:[%s1 + $0xc8] sm:$0xff]
  %v51 = vld [vmem:[%s1 + $0xd0] sm:$0xff]
  %v52 = vld [vmem:[%s1 + $0xd8] sm:$0xff]
  %v53 = vld [vmem:[%s1 + $0xe0] sm:$0xff]
  %v54 = vld [vmem:[%s1 + $0xe8] sm:$0xff]
  %v55 = vld [vmem:[%s1 + $0xf0] sm:$0xff]
  %v56 = vld [vmem:[%s1 + $0xf8] sm:$0xff]
  %v57 = vld [vmem:[%s1 + $0x100] sm:$0xff]
  %v58 = vld [vmem:[%s1 + $0x108] sm:$0xff]
  %v59 = vld [vmem:[%s1 + $0x110] sm:$0xff]
  %v60 = vld [vmem:[%s1 + $0x118] sm:$0xff]
  %v61 = vld [vmem:[%s1 + $0x120] sm:$0xff]
  %v62 = vld [vmem:[%s1 + $0x128] sm:$0xff]
  %v63 = vld [vmem:[%s1 + $0x130] sm:$0xff]
  %v64 = vld [vmem:[%s1 + $0x138] sm:$0xff]
  %v65 = vld [vmem:[%s1 + $0x140] sm:$0xff]
  %v66 = vld [vmem:[%s1 + $0x148] sm:$0xff]
  %v67 = vld [vmem:[%s1 + $0x150] sm:$0xff]
  %v68 = vld [vmem:[%s1 + $0x158] sm:$0xff]
  %v69 = vld [vmem:[%s1 + $0x160] sm:$0xff]
  %v70 = vld [vmem:[%s1 + $0x168] sm:$0xff]
  %v71 = vld [vmem:[%s1 + $0x170] sm:$0xff]
  %v72 = vld [vmem:[%s1 + $0x178] sm:$0xff]
  %v73 = vld [vmem:[%s1 + $0x180] sm:$0xff]
  %v74 = vld [vmem:[%s1 + $0x188] sm:$0xff]
  %v75 = vld [vmem:[%s1 + $0x190] sm:$0xff]
  %v76 = vld [vmem:[%s1 + $0x198] sm:$0xff]
  %v77 = vld [vmem:[%s1 + $0x1a0] sm:$0xff]
  %v78 = vld [vmem:[%s1 + $0x1a8] sm:$0xff]
  %v79 = vld [vmem:[%s1 + $0x1b0] sm:$0xff]
  %v80 = vld [vmem:[%s1 + $0x1b8] sm:$0xff]
  %v81 = vld [vmem:[%s1 + $0x1c0] sm:$0xff]
  %v82 = vld [vmem:[%s1 + $0x1c8] sm:$0xff]
  %v83 = vld [vmem:[%s1 + $0x1d0] sm:$0xff]
  %v84 = vld [vmem:[%s1 + $0x1d8] sm:$0xff]
  %v85 = vld [vmem:[%s1 + $0x1e0] sm:$0xff]
  %v86 = vld [vmem:[%s1 + $0x1e8] sm:$0xff]
  %v87 = vld [vmem:[%s1 + $0x1f0] sm:$0xff]
  %v88 = vld [vmem:[%s1 + $0x1f8] sm:$0xff]
  %v89 = vld [vmem:[%s1 + $0x200] sm:$0xff]
  %v90 = vld [vmem:[%s1 + $0x208] sm:$0xff]
  %v91 = vld [vmem:[%s1 + $0x210] sm:$0xff]
  %v92 = vld [vmem:[%s1 + $0x218] sm:$0xff]
  %v93 = vld [vmem:[%s1 + $0x220] sm:$0xff]
  %v94 = vld [vmem:[%s1 + $0x228] sm:$0xff]
  %v95 = vld [vmem:[%s1 + $0x230] sm:$0xff]
  %v96 = vld [vmem:[%s1 + $0x238] sm:$0xff]
  %v97 = vld [vmem:[%s1 + $0x240] sm:$0xff]
  %v98 = vld [vmem:[%s1 + $0x248] sm:$0xff]
  %v99 = vld [vmem:[%s1 + $0x250] sm:$0xff]
  %v100 = vld [vmem:[%s1 + $0x258] sm:$0xff]
  %v101 = vld [vmem:[%s1 + $0x260] sm:$0xff]
  %v102 = vld [vmem:[%s1 + $0x268] sm:$0xff]
  %v103 = vld [vmem:[%s1 + $0x270] sm:$0xff]
  %v104 = vld [vmem:[%s1 + $0x278] sm:$0xff]
  %v105 = vld [vmem:[%s1 + $0x280] sm:$0xff]
  %v106 = vld [vmem:[%s1 + $0x288] sm:$0xff]
  %v107 = vld [vmem:[%s1 + $0x290] sm:$0xff]
  %v108 = vld [vmem:[%s1 + $0x298] sm:$0xff]
  %v109 = vld [vmem:[%s1 + $0x2a0] sm:$0xff]
  %v110 = vld [vmem:[%s1 + $0x2a8] sm:$0xff]
  %v111 = vld [vmem:[%s1 + $0x2b0] sm:$0xff]
  %v112 = vld [vmem:[%s1 + $0x2b8] sm:$0xff]
  %v113 = vld [vmem:[%s1 + $0x2c0] sm:$0xff]
  %v114 = vld [vmem:[%s1 + $0x2c8] sm:$0xff]
  %v115 = vld [vmem:[%s1 + $0x2d0] sm:$0xff]
  %v116 = vld [vmem:[%s1 + $0x2d8] sm:$0xff]
  %v117 = vld [vmem:[%s1 + $0x2e0] sm:$0xff]
  %v118 = vld [vmem:[%s1 + $0x2e8] sm:$0xff]
  %v119 = vld [vmem:[%s1 + $0x2f0] sm:$0xff]
  %v120 = vld [vmem:[%s1 + $0x2f8] sm:$0xff]
  %v121 = vld [vmem:[%s1 + $0x300] sm:$0xff]
  %v122 = vld [vmem:[%s1 + $0x308] sm:$0xff]
  %v123 = vld [vmem:[%s1 + $0x310] sm:$0xff]
  %v124 = vld [vmem:[%s1 + $0x318] sm:$0xff]
  %v125 = vld [vmem:[%s1 + $0x320] sm:$0xff]
  %v126 = vld [vmem:[%s1 + $0x328] sm:$0xff]
  %v127 = vld [vmem:[%s1 + $0x330] sm:$0xff]
  %v128 = vld [vmem:[%s1 + $0x338] sm:$0xff]
  %v129 = vld [vmem:[%s1 + $0x340] sm:$0xff]
  %v130 = vld [vmem:[%s1 + $0x348] sm:$0xff]
  %v131 = vld [vmem:[%s1 + $0x350] sm:$0xff]
  %v132 = vld [vmem:[%s1 + $0x358] sm:$0xff]
  %v133 = vld [vmem:[%s1 + $0x360] sm:$0xff]
  %v134 = vld [vmem:[%s1 + $0x368] sm:$0xff]
  %v135 = vld [vmem:[%s1 + $0x370] sm:$0xff]
  %v136 = vld [vmem:[%s1 + $0x378] sm:$0xff]
  %v137 = vld [vmem:[%s1 + $0x380] sm:$0xff]
  %v138 = vld [vmem:[%s1 + $0x388] sm:$0xff]
  %v139 = vld [vmem:[%s1 + $0x390] sm:$0xff]
  %v140 = vld [vmem:[%s1 + $0x398] sm:$0xff]
  %v141 = vld [vmem:[%s1 + $0x3a0] sm:$0xff]
  %v142 = vld [vmem:[%s1 + $0x3a8] sm:$0xff]
  %v143 = vld [vmem:[%s1 + $0x3b0] sm:$0xff]
  %v144 = vld [vmem:[%s1 + $0x3b8] sm:$0xff]
  %v145 = vld [vmem:[%s1 + $0x3c0] sm:$0xff]
  %v146 = vld [vmem:[%s1 + $0x3c8] sm:$0xff]
  %v147 = vld [vmem:[%s1 + $0x3d0] sm:$0xff]
  %v148 = vld [vmem:[%s1 + $0x3d8] sm:$0xff]
  %v149 = vld [vmem:[%s1 + $0x3e0] sm:$0xff]
  %v150 = vld [vmem:[%s1 + $0x3e8] sm:$0xff]
  %v151 = vld [vmem:[%s1 + $0x3f0] sm:$0xff]
  %v152 = vld [vmem:[%s1 + $0x3f8] sm:$0xff]
  %v153 = vld [vmem:[%s1 + $0x400] sm:$0xff]
  %v154 = vld [vmem:[%s1 + $0x408] sm:$0xff]
  %v155 = vld [vmem:[%s1 + $0x410] sm:$0xff]
  %v156 = vld [vmem:[%s1 + $0x418] sm:$0xff]
  %v157 = vld [vmem:[%s1 + $0x420] sm:$0xff]
  %v158 = vld [vmem:[%s1 + $0x428] sm:$0xff]
  %v159 = vld [vmem:[%s1 + $0x430] sm:$0xff]
  %v160 = vld [vmem:[%s1 + $0x438] sm:$0xff]
  %v161 = vld [vmem:[%s1 + $0x440] sm:$0xff]
  %v162 = vld [vmem:[%s1 + $0x448] sm:$0xff]
  %v163 = vld [vmem:[%s1 + $0x450] sm:$0xff]
  %v164 = vld [vmem:[%s1 + $0x458] sm:$0xff]
  %v165 = vld [vmem:[%s1 + $0x460] sm:$0xff]
  %v166 = vld [vmem:[%s1 + $0x468] sm:$0xff]
  %v167 = vld [vmem:[%s1 + $0x470] sm:$0xff]
  %v168 = vld [vmem:[%s1 + $0x478] sm:$0xff]
  %v169 = vld [vmem:[%s1 + $0x480] sm:$0xff]
  %v170 = vld [vmem:[%s1 + $0x488] sm:$0xff]
  %v171 = vld [vmem:[%s1 + $0x490] sm:$0xff]
  %v172 = vld [vmem:[%s1 + $0x498] sm:$0xff]
  %v173 = vld [vmem:[%s1 + $0x4a0] sm:$0xff]
  %v174 = vld [vmem:[%s1 + $0x4a8] sm:$0xff]
  %v175 = vld [vmem:[%s1 + $0x4b0] sm:$0xff]
  %v176 = vld [vmem:[%s1 + $0x4b8] sm:$0xff]
  %v177 = vld [vmem:[%s1 + $0x4c0] sm:$0xff]
  %v178 = vld [vmem:[%s1 + $0x4c8] sm:$0xff]
  %v179 = vld [vmem:[%s1 + $0x4d0] sm:$0xff]
  %v180 = vld [vmem:[%s1 + $0x4d8] sm:$0xff]
  %v181 = vld [vmem:[%s1 + $0x4e0] sm:$0xff]
  %v182 = vld [vmem:[%s1 + $0x4e8] sm:$0xff]
  %v183 = vld [vmem:[%s1 + $0x4f0] sm:$0xff]
  %v184 = vld [vmem:[%s1 + $0x4f8] sm:$0xff]
  %v185 = vld [vmem:[%s1 + $0x500] sm:$0xff]
  %v186 = vld [vmem:[%s1 + $0x508] sm:$0xff]
  %v187 = vld [vmem:[%s1 + $0x510] sm:$0xff]
  %v188 = vld [vmem:[%s1 + $0x518] sm:$0xff]
  %v189 = vld [vmem:[%s1 + $0x520] sm:$0xff]
  %v190 = vld [vmem:[%s1 + $0x528] sm:$0xff]
  %v191 = vld [vmem:[%s1 + $0x530] sm:$0xff]
  %v192 = vld [vmem:[%s1 + $0x538] sm:$0xff]
  %v193 = vld [vmem:[%s1 + $0x540] sm:$0xff]
  %v194 = vld [vmem:[%s1 + $0x548] sm:$0xff]
  %v195 = vld [vmem:[%s1 + $0x550] sm:$0xff]
  %v196 = vld [vmem:[%s1 + $0x558] sm:$0xff]
  %v197 = vld [vmem:[%s1 + $0x560] sm:$0xff]
  %v198 = vld [vmem:[%s1 + $0x568] sm:$0xff]
  %v199 = vld [vmem:[%s1 + $0x570] sm:$0xff]
  %v200 = vld [vmem:[%s1 + $0x578] sm:$0xff]
  %v201 = vld [vmem:[%s1 + $0x580] sm:$0xff]
  %v202 = vld [vmem:[%s1 + $0x588] sm:$0xff]
  %v203 = vld [vmem:[%s1 + $0x590] sm:$0xff]
  %v204 = vld [vmem:[%s1 + $0x598] sm:$0xff]
  %v205 = vld [vmem:[%s1 + $0x5a0] sm:$0xff]
  %v206 = vld [vmem:[%s1 + $0x5a8] sm:$0xff]
  %v207 = vld [vmem:[%s1 + $0x5b0] sm:$0xff]
  %v208 = vld [vmem:[%s1 + $0x5b8] sm:$0xff]
  %v209 = vld [vmem:[%s1 + $0x5c0] sm:$0xff]
  %v210 = vld [vmem:[%s1 + $0x5c8] sm:$0xff]
  %v211 = vld [vmem:[%s1 + $0x5d0] sm:$0xff]
  %v212 = vld [vmem:[%s1 + $0x5d8] sm:$0xff]
  %v213 = vld [vmem:[%s1 + $0x5e0] sm:$0xff]
  %v214 = vld [vmem:[%s1 + $0x5e8] sm:$0xff]
  %v215 = vld [vmem:[%s1 + $0x5f0] sm:$0xff]
  %v216 = vld [vmem:[%s1 + $0x5f8] sm:$0xff]
  %v217 = vld [vmem:[%s1 + $0x600] sm:$0xff]
  %v218 = vld [vmem:[%s1 + $0x608] sm:$0xff]
  %v219 = vld [vmem:[%s1 + $0x610] sm:$0xff]
  %v220 = vld [vmem:[%s1 + $0x618] sm:$0xff]
  %v221 = vld [vmem:[%s1 + $0x620] sm:$0xff]
  %v222 = vld [vmem:[%s1 + $0x628] sm:$0xff]
  %v223 = vld [vmem:[%s1 + $0x630] sm:$0xff]
  %v224 = vld [vmem:[%s1 + $0x638] sm:$0xff]
  %v225 = vld [vmem:[%s1 + $0x640] sm:$0xff]
  %v226 = vld [vmem:[%s1 + $0x648] sm:$0xff]
  %v227 = vld [vmem:[%s1 + $0x650] sm:$0xff]
  %v228 = vld [vmem:[%s1 + $0x658] sm:$0xff]
  %v229 = vld [vmem:[%s1 + $0x660] sm:$0xff]
  %v230 = vld [vmem:[%s1 + $0x668] sm:$0xff]
  %v231 = vld [vmem:[%s1 + $0x670] sm:$0xff]
  %v232 = vld [vmem:[%s1 + $0x678] sm:$0xff]
  %v233 = vld [vmem:[%s1 + $0x680] sm:$0xff]
  %v234 = vld [vmem:[%s1 + $0x688] sm:$0xff]
  %v235 = vld [vmem:[%s1 + $0x690] sm:$0xff]
  %v236 = vld [vmem:[%s1 + $0x698] sm:$0xff]
  %v237 = vld [vmem:[%s1 + $0x6a0] sm:$0xff]
  %v238 = vld [vmem:[%s1 + $0x6a8] sm:$0xff]
  %v239 = vld [vmem:[%s1 + $0x6b0] sm:$0xff]
  %v240 = vld [vmem:[%s1 + $0x6b8] sm:$0xff]
  %v241 = vld [vmem:[%s1 + $0x6c0] sm:$0xff]
  %v242 = vld [vmem:[%s1 + $0x6c8] sm:$0xff]
  %v243 = vld [vmem:[%s1 + $0x6d0] sm:$0xff]
  %v244 = vld [vmem:[%s1 + $0x6d8] sm:$0xff]
  %v245 = vld [vmem:[%s1 + $0x6e0] sm:$0xff]
  %v246 = vld [vmem:[%s1 + $0x6e8] sm:$0xff]
  %v247 = vld [vmem:[%s1 + $0x6f0] sm:$0xff]
  %v248 = vld [vmem:[%s1 + $0x6f8] sm:$0xff]
  %v249 = vld [vmem:[%s1 + $0x700] sm:$0xff]
  %v250 = vld [vmem:[%s1 + $0x708] sm:$0xff]
  %v251 = vld [vmem:[%s1 + $0x710] sm:$0xff]
  %v252 = vld [vmem:[%s1 + $0x718] sm:$0xff]
  %v253 = vld [vmem:[%s1 + $0x720] sm:$0xff]
  %v254 = vld [vmem:[%s1 + $0x728] sm:$0xff]
  %v255 = vld [vmem:[%s1 + $0x730] sm:$0xff]
  %v256 = vld [vmem:[%s1 + $0x738] sm:$0xff]
  %v257 = vld [vmem:[%s1 + $0x740] sm:$0xff]
  %v258 = vld [vmem:[%s1 + $0x748] sm:$0xff]
  %v259 = vld [vmem:[%s1 + $0x750] sm:$0xff]
  %v260 = vld [vmem:[%s1 + $0x758] sm:$0xff]
  %v261 = vld [vmem:[%s1 + $0x760] sm:$0xff]
  %v262 = vld [vmem:[%s1 + $0x768] sm:$0xff]
  %v263 = vld [vmem:[%s1 + $0x770] sm:$0xff]
  %v264 = vld [vmem:[%s1 + $0x778] sm:$0xff]
  %v265 = vld [vmem:[%s1 + $0x780] sm:$0xff]
  %v266 = vld [vmem:[%s1 + $0x788] sm:$0xff]
  %v267 = vld [vmem:[%s1 + $0x790] sm:$0xff]
  %v268 = vld [vmem:[%s1 + $0x798] sm:$0xff]
  %v269 = vld [vmem:[%s1 + $0x7a0] sm:$0xff]
  %v270 = vld [vmem:[%s1 + $0x7a8] sm:$0xff]
  %v271 = vld [vmem:[%s1 + $0x7b0] sm:$0xff]
  %v272 = vld [vmem:[%s1 + $0x7b8] sm:$0xff]
  %v273 = vld [vmem:[%s1 + $0x7c0] sm:$0xff]
  %v274 = vld [vmem:[%s1 + $0x7c8] sm:$0xff]
  %v275 = vld [vmem:[%s1 + $0x7d0] sm:$0xff]
  %v276 = vld [vmem:[%s1 + $0x7d8] sm:$0xff]
  %v277 = vld [vmem:[%s1 + $0x7e0] sm:$0xff]
  %v278 = vld [vmem:[%s1 + $0x7e8] sm:$0xff]
  %v279 = vld [vmem:[%s1 + $0x7f0] sm:$0xff]
  %v280 = vld [vmem:[%s1 + $0x7f8] sm:$0xff]
  %v281 = vld [vmem:[%s1 + $0x800] sm:$0xff]
  %v282 = vld [vmem:[%s1 + $0x808] sm:$0xff]
  %v283 = vld [vmem:[%s1 + $0x810] sm:$0xff]
  %v284 = vld [vmem:[%s1 + $0x818] sm:$0xff]
  %v285 = vld [vmem:[%s1 + $0x820] sm:$0xff]
  %v286 = vld [vmem:[%s1 + $0x828] sm:$0xff]
  %v287 = vld [vmem:[%s1 + $0x830] sm:$0xff]
  %v288 = vld [vmem:[%s1 + $0x838] sm:$0xff]
  %v289 = vld [vmem:[%s1 + $0x840] sm:$0xff]
  %v290 = vld [vmem:[%s1 + $0x848] sm:$0xff]
  %v291 = vld [vmem:[%s1 + $0x850] sm:$0xff]
  %v292 = vld [vmem:[%s1 + $0x858] sm:$0xff]
  %v293 = vld [vmem:[%s1 + $0x860] sm:$0xff]
  %v294 = vld [vmem:[%s1 + $0x868] sm:$0xff]
  %v295 = vld [vmem:[%s1 + $0x870] sm:$0xff]
  %v296 = vld [vmem:[%s1 + $0x878] sm:$0xff]
  %v297 = vld [vmem:[%s1 + $0x880] sm:$0xff]
  %v298 = vld [vmem:[%s1 + $0x888] sm:$0xff]
  %v299 = vld [vmem:[%s1 + $0x890] sm:$0xff]
  %v300 = vld [vmem:[%s1 + $0x898] sm:$0xff]
  %v301 = vld [vmem:[%s1 + $0x8a0] sm:$0xff]
  %v302 = vld [vmem:[%s1 + $0x8a8] sm:$0xff]
  %v303 = vld [vmem:[%s1 + $0x8b0] sm:$0xff]
  %v304 = vld [vmem:[%s1 + $0x8b8] sm:$0xff]
  %v305 = vld [vmem:[%s1 + $0x8c0] sm:$0xff]
  %v306 = vld [vmem:[%s1 + $0x8c8] sm:$0xff]
  %v307 = vld [vmem:[%s1 + $0x8d0] sm:$0xff]
  %v308 = vld [vmem:[%s1 + $0x8d8] sm:$0xff]
  %v309 = vld [vmem:[%s1 + $0x8e0] sm:$0xff]
  %v310 = vld [vmem:[%s1 + $0x8e8] sm:$0xff]
  %v311 = vld [vmem:[%s1 + $0x8f0] sm:$0xff]
  %v312 = vld [vmem:[%s1 + $0x8f8] sm:$0xff]
  %v313 = vld [vmem:[%s1 + $0x900] sm:$0xff]
  %v314 = vld [vmem:[%s1 + $0x908] sm:$0xff]
  %v315 = vld [vmem:[%s1 + $0x910] sm:$0xff]
  %v316 = vld [vmem:[%s1 + $0x918] sm:$0xff]
  %v317 = vld [vmem:[%s1 + $0x920] sm:$0xff]
  %v318 = vld [vmem:[%s1 + $0x928] sm:$0xff]
  %v319 = vld [vmem:[%s1 + $0x930] sm:$0xff]
  %v320 = vld [vmem:[%s1 + $0x938] sm:$0xff]
  %v321 = vld [vmem:[%s1 + $0x940] sm:$0xff]
  %v322 = vld [vmem:[%s1 + $0x948] sm:$0xff]
  %v323 = vld [vmem:[%s1 + $0x950] sm:$0xff]
  %v324 = vld [vmem:[%s1 + $0x958] sm:$0xff]
  %v325 = vld [vmem:[%s1 + $0x960] sm:$0xff]
  %v326 = vld [vmem:[%s1 + $0x968] sm:$0xff]
  %v327 = vld [vmem:[%s1 + $0x970] sm:$0xff]
  %v328 = vld [vmem:[%s1 + $0x978] sm:$0xff]
  %v329 = vld [vmem:[%s1 + $0x980] sm:$0xff]
  %v330 = vld [vmem:[%s1 + $0x988] sm:$0xff]
  %v331 = vld [vmem:[%s1 + $0x990] sm:$0xff]
  %v332 = vld [vmem:[%s1 + $0x998] sm:$0xff]
  %v333 = vld [vmem:[%s1 + $0x9a0] sm:$0xff]
  %v334 = vld [vmem:[%s1 + $0x9a8] sm:$0xff]
  %v335 = vld [vmem:[%s1 + $0x9b0] sm:$0xff]
  %v336 = vld [vmem:[%s1 + $0x9b8] sm:$0xff]
  %v337 = vld [vmem:[%s1 + $0x9c0] sm:$0xf]
  %v338 = vld [vmem:[%s1 + $0x9c8] sm:$0xf]
  %v339 = vld [vmem:[%s1 + $0x9d0] sm:$0xf]
  %v340 = vld [vmem:[%s1 + $0x9d8] sm:$0xf]
  %v341 = vld [vmem:[%s1 + $0x9e0] sm:$0xf]
  %v342 = vld [vmem:[%s1 + $0x9e8] sm:$0xf]
  %v343 = vld [vmem:[%s1 + $0x9f0] sm:$0xf]
  %v344 = vld [vmem:[%s1 + $0x9f8] sm:$0xf]
  %v345 = vld [vmem:[%s1 + $0xa00] sm:$0xf]
  %v346 = vld [vmem:[%s1 + $0xa08] sm:$0xf]
  %v347 = vld [vmem:[%s1 + $0xa10] sm:$0xf]
  %v348 = vld [vmem:[%s1 + $0xa18] sm:$0xf]
  %v349 = vld [vmem:[%s1 + $0xa20] sm:$0xf]
  %v350 = vld [vmem:[%s2] sm:$0xff]
  %v351 = vld [vmem:[%s2 + $0x8] sm:$0x1f]
  %v354 = vlaneseq
  %v355 = vshrl.u32 %v354, 7
  %v356 = vsub.s32 0, %v355
  %v357 = vrot.slane %v350, %v356
  %v358 = vlaneseq
  %v359 = vshrl.u32 %v358, 7
  %v360 = vsub.s32 1, %v359
  %v361 = vrot.slane %v350, %v360
  %v362 = vlaneseq
  %v363 = vshrl.u32 %v362, 7
  %v364 = vsub.s32 2, %v363
  %v365 = vrot.slane %v350, %v364
  %v366 = vlaneseq
  %v367 = vshrl.u32 %v366, 7
  %v368 = vsub.s32 3, %v367
  %v369 = vrot.slane %v350, %v368
  %v370 = vlaneseq
  %v371 = vshrl.u32 %v370, 7
  %v372 = vsub.s32 4, %v371
  %v373 = vrot.slane %v350, %v372
  %v374 = vlaneseq
  %v375 = vshrl.u32 %v374, 7
  %v376 = vsub.s32 5, %v375
  %v377 = vrot.slane %v350, %v376
  %v378 = vlaneseq
  %v379 = vshrl.u32 %v378, 7
  %v380 = vsub.s32 6, %v379
  %v381 = vrot.slane %v350, %v380
  %v382 = vlaneseq
  %v383 = vshrl.u32 %v382, 7
  %v384 = vsub.s32 7, %v383
  %v385 = vrot.slane %v350, %v384
  %v386 = vlaneseq
  %v387 = vshrl.u32 %v386, 7
  %v388 = vsub.s32 0, %v387
  %v389 = vrot.slane %v351, %v388
  %v390 = vlaneseq
  %v391 = vshrl.u32 %v390, 7
  %v392 = vsub.s32 1, %v391
  %v393 = vrot.slane %v351, %v392
  %v394 = vlaneseq
  %v395 = vshrl.u32 %v394, 7
  %v396 = vsub.s32 2, %v395
  %v397 = vrot.slane %v351, %v396
  %v398 = vlaneseq
  %v399 = vshrl.u32 %v398, 7
  %v400 = vsub.s32 3, %v399
  %v401 = vrot.slane %v351, %v400
  %v402 = vlaneseq
  %v403 = vshrl.u32 %v402, 7
  %v404 = vsub.s32 4, %v403
  %v405 = vrot.slane %v351, %v404
  %vm419 = vcmask 556032
  %v421 = vsel %vm419, %v22, 0
  %v424 = vsel %vm419, %v24, 0
  %vm426 = vcmask 1043456
  %v428 = vsel %vm426, %v337, 0
  %v431 = vsel %vm426, %v338, 0
  %v434 = vsel %vm426, %v339, 0
  %v437 = vsel %vm426, %v340, 0
  %v440 = vsel %vm426, %v341, 0
  %v443 = vsel %vm426, %v342, 0
  %v446 = vsel %vm426, %v343, 0
  %v449 = vsel %vm426, %v344, 0
  %v452 = vsel %vm426, %v345, 0
  %v455 = vsel %vm426, %v346, 0
  %v458 = vsel %vm426, %v347, 0
  %v461 = vsel %vm426, %v348, 0
  %v464 = vsel %vm426, %v349, 0
  %466 = vmatprep.subr.mxu0 %v221
  %467 = vmatpush1.msra.mxu0 %v220
  %468 = vmatprep.subr.mxu0 %v208
  %469 = vmatpush1.msra.mxu0 %v207
  %470 = vmatprep.subr.mxu0 %v195
  %471 = vmatpush1.msra.mxu0 %v194
  %472 = vmatprep.subr.mxu0 %v182
  %473 = vmatpush1.msra.mxu0 %v181
  %474 = vmatprep.subr.mxu0 %v169
  %475 = vmatpush1.msra.mxu0 %v168
  %476 = vmatprep.subr.mxu0 %v156
  %477 = vmatpush1.msra.mxu0 %v155
  %478 = vmatprep.subr.mxu0 %v143
  %479 = vmatpush1.msra.mxu0 %v142
  %480 = vmatprep.subr.mxu0 %v130
  %481 = vmatpush1.msra.mxu0 %v129
  %482 = vmatprep.subr.mxu0 %v117
  %483 = vmatpush1.msra.mxu0 %v116
  %484 = vmatprep.subr.mxu0 %v104
  %485 = vmatpush1.msra.mxu0 %v103
  %486 = vmatprep.subr.mxu0 %v91
  %487 = vmatpush1.msra.mxu0 %v90
  %488 = vmatprep.subr.mxu0 %v78
  %489 = vmatpush1.msra.mxu0 %v77
  %490 = vmatprep.subr.mxu0 %v65
  %491 = vmatpush1.msra.mxu0 %v64
  %492 = vmatprep.subr.mxu0 %v52
  %493 = vmatpush1.msra.mxu0 %v51
  %494 = vmatprep.subr.mxu0 %v39
  %495 = vmatpush1.msra.mxu0 %v38
  %496 = vmatprep.subr.mxu0 %v26
  %497 = vmatpush1.msra.mxu0 %v25
  %498 = vmatprep.subr.mxu0 0.0
  %499 = vmatpush2.msra.mxu0 0.0
  %500 = vmatprep.subr.mxu0 0.0
  %501 = vmatpush2.msra.mxu0 0.0
  %502 = vmatprep.subr.mxu0 0.0
  %503 = vmatpush2.msra.mxu0 0.0
  %504 = vmatprep.subr.mxu0 0.0
  %505 = vmatpush2.msra.mxu0 0.0
  %506 = vmatprep.subr.mxu0 0.0
  %507 = vmatpush2.msra.mxu0 0.0
  %508 = vmatprep.subr.mxu0 0.0
  %509 = vmatpush2.msra.mxu0 0.0
  %510 = vmatprep.subr.mxu0 0.0
  %511 = vmatpush2.msra.mxu0 0.0
  %512 = vmatprep.subr.mxu0 %v431
  %513 = vmatpush2.msra.mxu0 %v428
  %514 = vmatprep.subr.mxu0 %v325
  %515 = vmatpush2.msra.mxu0 %v324
  %516 = vmatprep.subr.mxu0 %v312
  %517 = vmatpush2.msra.mxu0 %v311
  %518 = vmatprep.subr.mxu0 %v299
  %519 = vmatpush2.msra.mxu0 %v298
  %520 = vmatprep.subr.mxu0 %v286
  %521 = vmatpush2.msra.mxu0 %v285
  %522 = vmatprep.subr.mxu0 %v273
  %523 = vmatpush2.msra.mxu0 %v272
  %524 = vmatprep.subr.mxu0 %v260
  %525 = vmatpush2.msra.mxu0 %v259
  %526 = vmatprep.subr.mxu0 %v247
  %527 = vmatpush2.msra.mxu0 %v246
  %528 = vmatprep.subr.mxu0 %v234
  %529 = vmatpush2.msra.mxu0 %v233
  %530 = vmatprep.mubr.f32.mxu0 %v421
  %531 = vmatmul.mubr.f32.gmra.mxu0 %v21
  %v532 = vpop.f32.mrf.mxu0
  %v533 = vadd.f32 %v357, %v532
  %v534 = vpop.f32.mrf.mxu0
  %v535 = vadd.f32 %v361, %v534
  %536 = vmatprep.mubr.f32.mxu0 %v424
  %537 = vmatmul.mubr.f32.gmra.mxu0 %v23
  %v538 = vpop.f32.mrf.mxu0
  %v539 = vadd.f32 %v357, %v538
  %v540 = vpop.f32.mrf.mxu0
  %v541 = vadd.f32 %v361, %v540
  %542 = vdwg.mxu0
  %543 = vmatprep.subr.mxu0 %v223
  %544 = vmatpush1.msra.mxu0 %v222
  %545 = vmatprep.subr.mxu0 %v210
  %546 = vmatpush1.msra.mxu0 %v209
  %547 = vmatprep.subr.mxu0 %v197
  %548 = vmatpush1.msra.mxu0 %v196
  %549 = vmatprep.subr.mxu0 %v184
  %550 = vmatpush1.msra.mxu0 %v183
  %551 = vmatprep.subr.mxu0 %v171
  %552 = vmatpush1.msra.mxu0 %v170
  %553 = vmatprep.subr.mxu0 %v158
  %554 = vmatpush1.msra.mxu0 %v157
  %555 = vmatprep.subr.mxu0 %v145
  %556 = vmatpush1.msra.mxu0 %v144
  %557 = vmatprep.subr.mxu0 %v132
  %558 = vmatpush1.msra.mxu0 %v131
  %559 = vmatprep.subr.mxu0 %v119
  %560 = vmatpush1.msra.mxu0 %v118
  %561 = vmatprep.subr.mxu0 %v106
  %562 = vmatpush1.msra.mxu0 %v105
  %563 = vmatprep.subr.mxu0 %v93
  %564 = vmatpush1.msra.mxu0 %v92
  %565 = vmatprep.subr.mxu0 %v80
  %566 = vmatpush1.msra.mxu0 %v79
  %567 = vmatprep.subr.mxu0 %v67
  %568 = vmatpush1.msra.mxu0 %v66
  %569 = vmatprep.subr.mxu0 %v54
  %570 = vmatpush1.msra.mxu0 %v53
  %571 = vmatprep.subr.mxu0 %v41
  %572 = vmatpush1.msra.mxu0 %v40
  %573 = vmatprep.subr.mxu0 %v28
  %574 = vmatpush1.msra.mxu0 %v27
  %575 = vmatprep.subr.mxu0 0.0
  %576 = vmatpush2.msra.mxu0 0.0
  %577 = vmatprep.subr.mxu0 0.0
  %578 = vmatpush2.msra.mxu0 0.0
  %579 = vmatprep.subr.mxu0 0.0
  %580 = vmatpush2.msra.mxu0 0.0
  %581 = vmatprep.subr.mxu0 0.0
  %582 = vmatpush2.msra.mxu0 0.0
  %583 = vmatprep.subr.mxu0 0.0
  %584 = vmatpush2.msra.mxu0 0.0
  %585 = vmatprep.subr.mxu0 0.0
  %586 = vmatpush2.msra.mxu0 0.0
  %587 = vmatprep.subr.mxu0 0.0
  %588 = vmatpush2.msra.mxu0 0.0
  %589 = vmatprep.subr.mxu0 %v437
  %590 = vmatpush2.msra.mxu0 %v434
  %591 = vmatprep.subr.mxu0 %v327
  %592 = vmatpush2.msra.mxu0 %v326
  %593 = vmatprep.subr.mxu0 %v314
  %594 = vmatpush2.msra.mxu0 %v313
  %595 = vmatprep.subr.mxu0 %v301
  %596 = vmatpush2.msra.mxu0 %v300
  %597 = vmatprep.subr.mxu0 %v288
  %598 = vmatpush2.msra.mxu0 %v287
  %599 = vmatprep.subr.mxu0 %v275
  %600 = vmatpush2.msra.mxu0 %v274
  %601 = vmatprep.subr.mxu0 %v262
  %602 = vmatpush2.msra.mxu0 %v261
  %603 = vmatprep.subr.mxu0 %v249
  %604 = vmatpush2.msra.mxu0 %v248
  %605 = vmatprep.subr.mxu0 %v236
  %606 = vmatpush2.msra.mxu0 %v235
  %607 = vmatprep.mubr.f32.mxu0 %v421
  %608 = vmatmul.mubr.f32.gmra.mxu0 %v21
  %v609 = vpop.f32.mrf.mxu0
  %v610 = vadd.f32 %v365, %v609
  %v611 = vpop.f32.mrf.mxu0
  %v612 = vadd.f32 %v369, %v611
  %613 = vmatprep.mubr.f32.mxu0 %v424
  %614 = vmatmul.mubr.f32.gmra.mxu0 %v23
  %v615 = vpop.f32.mrf.mxu0
  %v616 = vadd.f32 %v365, %v615
  %v617 = vpop.f32.mrf.mxu0
  %v618 = vadd.f32 %v369, %v617
  %619 = vdwg.mxu0
  %620 = vmatprep.subr.mxu0 %v225
  %621 = vmatpush1.msra.mxu0 %v224
  %622 = vmatprep.subr.mxu0 %v212
  %623 = vmatpush1.msra.mxu0 %v211
  %624 = vmatprep.subr.mxu0 %v199
  %625 = vmatpush1.msra.mxu0 %v198
  %626 = vmatprep.subr.mxu0 %v186
  %627 = vmatpush1.msra.mxu0 %v185
  %628 = vmatprep.subr.mxu0 %v173
  %629 = vmatpush1.msra.mxu0 %v172
  %630 = vmatprep.subr.mxu0 %v160
  %631 = vmatpush1.msra.mxu0 %v159
  %632 = vmatprep.subr.mxu0 %v147
  %633 = vmatpush1.msra.mxu0 %v146
  %634 = vmatprep.subr.mxu0 %v134
  %635 = vmatpush1.msra.mxu0 %v133
  %636 = vmatprep.subr.mxu0 %v121
  %637 = vmatpush1.msra.mxu0 %v120
  %638 = vmatprep.subr.mxu0 %v108
  %639 = vmatpush1.msra.mxu0 %v107
  %640 = vmatprep.subr.mxu0 %v95
  %641 = vmatpush1.msra.mxu0 %v94
  %642 = vmatprep.subr.mxu0 %v82
  %643 = vmatpush1.msra.mxu0 %v81
  %644 = vmatprep.subr.mxu0 %v69
  %645 = vmatpush1.msra.mxu0 %v68
  %646 = vmatprep.subr.mxu0 %v56
  %647 = vmatpush1.msra.mxu0 %v55
  %648 = vmatprep.subr.mxu0 %v43
  %649 = vmatpush1.msra.mxu0 %v42
  %650 = vmatprep.subr.mxu0 %v30
  %651 = vmatpush1.msra.mxu0 %v29
  %652 = vmatprep.subr.mxu0 0.0
  %653 = vmatpush2.msra.mxu0 0.0
  %654 = vmatprep.subr.mxu0 0.0
  %655 = vmatpush2.msra.mxu0 0.0
  %656 = vmatprep.subr.mxu0 0.0
  %657 = vmatpush2.msra.mxu0 0.0
  %658 = vmatprep.subr.mxu0 0.0
  %659 = vmatpush2.msra.mxu0 0.0
  %660 = vmatprep.subr.mxu0 0.0
  %661 = vmatpush2.msra.mxu0 0.0
  %662 = vmatprep.subr.mxu0 0.0
  %663 = vmatpush2.msra.mxu0 0.0
  %664 = vmatprep.subr.mxu0 0.0
  %665 = vmatpush2.msra.mxu0 0.0
  %666 = vmatprep.subr.mxu0 %v443
  %667 = vmatpush2.msra.mxu0 %v440
  %668 = vmatprep.subr.mxu0 %v329
  %669 = vmatpush2.msra.mxu0 %v328
  %670 = vmatprep.subr.mxu0 %v316
  %671 = vmatpush2.msra.mxu0 %v315
  %672 = vmatprep.subr.mxu0 %v303
  %673 = vmatpush2.msra.mxu0 %v302
  %674 = vmatprep.subr.mxu0 %v290
  %675 = vmatpush2.msra.mxu0 %v289
  %676 = vmatprep.subr.mxu0 %v277
  %677 = vmatpush2.msra.mxu0 %v276
  %678 = vmatprep.subr.mxu0 %v264
  %679 = vmatpush2.msra.mxu0 %v263
  %680 = vmatprep.subr.mxu0 %v251
  %681 = vmatpush2.msra.mxu0 %v250
  %682 = vmatprep.subr.mxu0 %v238
  %683 = vmatpush2.msra.mxu0 %v237
  %684 = vmatprep.mubr.f32.mxu0 %v421
  %685 = vmatmul.mubr.f32.gmra.mxu0 %v21
  %v686 = vpop.f32.mrf.mxu0
  %v687 = vadd.f32 %v373, %v686
  %v688 = vpop.f32.mrf.mxu0
  %v689 = vadd.f32 %v377, %v688
  %690 = vmatprep.mubr.f32.mxu0 %v424
  %691 = vmatmul.mubr.f32.gmra.mxu0 %v23
  %v692 = vpop.f32.mrf.mxu0
  %v693 = vadd.f32 %v373, %v692
  %v694 = vpop.f32.mrf.mxu0
  %v695 = vadd.f32 %v377, %v694
  %696 = vdwg.mxu0
  %697 = vmatprep.subr.mxu0 %v227
  %698 = vmatpush1.msra.mxu0 %v226
  %699 = vmatprep.subr.mxu0 %v214
  %700 = vmatpush1.msra.mxu0 %v213
  %701 = vmatprep.subr.mxu0 %v201
  %702 = vmatpush1.msra.mxu0 %v200
  %703 = vmatprep.subr.mxu0 %v188
  %704 = vmatpush1.msra.mxu0 %v187
  %705 = vmatprep.subr.mxu0 %v175
  %706 = vmatpush1.msra.mxu0 %v174
  %707 = vmatprep.subr.mxu0 %v162
  %708 = vmatpush1.msra.mxu0 %v161
  %709 = vmatprep.subr.mxu0 %v149
  %710 = vmatpush1.msra.mxu0 %v148
  %711 = vmatprep.subr.mxu0 %v136
  %712 = vmatpush1.msra.mxu0 %v135
  %713 = vmatprep.subr.mxu0 %v123
  %714 = vmatpush1.msra.mxu0 %v122
  %715 = vmatprep.subr.mxu0 %v110
  %716 = vmatpush1.msra.mxu0 %v109
  %717 = vmatprep.subr.mxu0 %v97
  %718 = vmatpush1.msra.mxu0 %v96
  %719 = vmatprep.subr.mxu0 %v84
  %720 = vmatpush1.msra.mxu0 %v83
  %721 = vmatprep.subr.mxu0 %v71
  %722 = vmatpush1.msra.mxu0 %v70
  %723 = vmatprep.subr.mxu0 %v58
  %724 = vmatpush1.msra.mxu0 %v57
  %725 = vmatprep.subr.mxu0 %v45
  %726 = vmatpush1.msra.mxu0 %v44
  %727 = vmatprep.subr.mxu0 %v32
  %728 = vmatpush1.msra.mxu0 %v31
  %729 = vmatprep.subr.mxu0 0.0
  %730 = vmatpush2.msra.mxu0 0.0
  %731 = vmatprep.subr.mxu0 0.0
  %732 = vmatpush2.msra.mxu0 0.0
  %733 = vmatprep.subr.mxu0 0.0
  %734 = vmatpush2.msra.mxu0 0.0
  %735 = vmatprep.subr.mxu0 0.0
  %736 = vmatpush2.msra.mxu0 0.0
  %737 = vmatprep.subr.mxu0 0.0
  %738 = vmatpush2.msra.mxu0 0.0
  %739 = vmatprep.subr.mxu0 0.0
  %740 = vmatpush2.msra.mxu0 0.0
  %741 = vmatprep.subr.mxu0 0.0
  %742 = vmatpush2.msra.mxu0 0.0
  %743 = vmatprep.subr.mxu0 %v449
  %744 = vmatpush2.msra.mxu0 %v446
  %745 = vmatprep.subr.mxu0 %v331
  %746 = vmatpush2.msra.mxu0 %v330
  %747 = vmatprep.subr.mxu0 %v318
  %748 = vmatpush2.msra.mxu0 %v317
  %749 = vmatprep.subr.mxu0 %v305
  %750 = vmatpush2.msra.mxu0 %v304
  %751 = vmatprep.subr.mxu0 %v292
  %752 = vmatpush2.msra.mxu0 %v291
  %753 = vmatprep.subr.mxu0 %v279
  %754 = vmatpush2.msra.mxu0 %v278
  %755 = vmatprep.subr.mxu0 %v266
  %756 = vmatpush2.msra.mxu0 %v265
  %757 = vmatprep.subr.mxu0 %v253
  %758 = vmatpush2.msra.mxu0 %v252
  %759 = vmatprep.subr.mxu0 %v240
  %760 = vmatpush2.msra.mxu0 %v239
  %761 = vmatprep.mubr.f32.mxu0 %v421
  %762 = vmatmul.mubr.f32.gmra.mxu0 %v21
  %v763 = vpop.f32.mrf.mxu0
  %v764 = vadd.f32 %v381, %v763
  %v765 = vpop.f32.mrf.mxu0
  %v766 = vadd.f32 %v385, %v765
  %767 = vmatprep.mubr.f32.mxu0 %v424
  %768 = vmatmul.mubr.f32.gmra.mxu0 %v23
  %v769 = vpop.f32.mrf.mxu0
  %v770 = vadd.f32 %v381, %v769
  %v771 = vpop.f32.mrf.mxu0
  %v772 = vadd.f32 %v385, %v771
  %773 = vdwg.mxu0
  %774 = vmatprep.subr.mxu0 %v229
  %775 = vmatpush1.msra.mxu0 %v228
  %776 = vmatprep.subr.mxu0 %v216
  %777 = vmatpush1.msra.mxu0 %v215
  %778 = vmatprep.subr.mxu0 %v203
  %779 = vmatpush1.msra.mxu0 %v202
  %780 = vmatprep.subr.mxu0 %v190
  %781 = vmatpush1.msra.mxu0 %v189
  %782 = vmatprep.subr.mxu0 %v177
  %783 = vmatpush1.msra.mxu0 %v176
  %784 = vmatprep.subr.mxu0 %v164
  %785 = vmatpush1.msra.mxu0 %v163
  %786 = vmatprep.subr.mxu0 %v151
  %787 = vmatpush1.msra.mxu0 %v150
  %788 = vmatprep.subr.mxu0 %v138
  %789 = vmatpush1.msra.mxu0 %v137
  %790 = vmatprep.subr.mxu0 %v125
  %791 = vmatpush1.msra.mxu0 %v124
  %792 = vmatprep.subr.mxu0 %v112
  %793 = vmatpush1.msra.mxu0 %v111
  %794 = vmatprep.subr.mxu0 %v99
  %795 = vmatpush1.msra.mxu0 %v98
  %796 = vmatprep.subr.mxu0 %v86
  %797 = vmatpush1.msra.mxu0 %v85
  %798 = vmatprep.subr.mxu0 %v73
  %799 = vmatpush1.msra.mxu0 %v72
  %800 = vmatprep.subr.mxu0 %v60
  %801 = vmatpush1.msra.mxu0 %v59
  %802 = vmatprep.subr.mxu0 %v47
  %803 = vmatpush1.msra.mxu0 %v46
  %804 = vmatprep.subr.mxu0 %v34
  %805 = vmatpush1.msra.mxu0 %v33
  %806 = vmatprep.subr.mxu0 0.0
  %807 = vmatpush2.msra.mxu0 0.0
  %808 = vmatprep.subr.mxu0 0.0
  %809 = vmatpush2.msra.mxu0 0.0
  %810 = vmatprep.subr.mxu0 0.0
  %811 = vmatpush2.msra.mxu0 0.0
  %812 = vmatprep.subr.mxu0 0.0
  %813 = vmatpush2.msra.mxu0 0.0
  %814 = vmatprep.subr.mxu0 0.0
  %815 = vmatpush2.msra.mxu0 0.0
  %816 = vmatprep.subr.mxu0 0.0
  %817 = vmatpush2.msra.mxu0 0.0
  %818 = vmatprep.subr.mxu0 0.0
  %819 = vmatpush2.msra.mxu0 0.0
  %820 = vmatprep.subr.mxu0 %v455
  %821 = vmatpush2.msra.mxu0 %v452
  %822 = vmatprep.subr.mxu0 %v333
  %823 = vmatpush2.msra.mxu0 %v332
  %824 = vmatprep.subr.mxu0 %v320
  %825 = vmatpush2.msra.mxu0 %v319
  %826 = vmatprep.subr.mxu0 %v307
  %827 = vmatpush2.msra.mxu0 %v306
  %828 = vmatprep.subr.mxu0 %v294
  %829 = vmatpush2.msra.mxu0 %v293
  %830 = vmatprep.subr.mxu0 %v281
  %831 = vmatpush2.msra.mxu0 %v280
  %832 = vmatprep.subr.mxu0 %v268
  %833 = vmatpush2.msra.mxu0 %v267
  %834 = vmatprep.subr.mxu0 %v255
  %835 = vmatpush2.msra.mxu0 %v254
  %836 = vmatprep.subr.mxu0 %v242
  %837 = vmatpush2.msra.mxu0 %v241
  %838 = vmatprep.mubr.f32.mxu0 %v421
  %839 = vmatmul.mubr.f32.gmra.mxu0 %v21
  %v840 = vpop.f32.mrf.mxu0
  %v841 = vadd.f32 %v389, %v840
  %v842 = vpop.f32.mrf.mxu0
  %v843 = vadd.f32 %v393, %v842
  %844 = vmatprep.mubr.f32.mxu0 %v424
  %845 = vmatmul.mubr.f32.gmra.mxu0 %v23
  %v846 = vpop.f32.mrf.mxu0
  %v847 = vadd.f32 %v389, %v846
  %v848 = vpop.f32.mrf.mxu0
  %v849 = vadd.f32 %v393, %v848
  %850 = vdwg.mxu0
  %851 = vmatprep.subr.mxu0 %v231
  %852 = vmatpush1.msra.mxu0 %v230
  %853 = vmatprep.subr.mxu0 %v218
  %854 = vmatpush1.msra.mxu0 %v217
  %855 = vmatprep.subr.mxu0 %v205
  %856 = vmatpush1.msra.mxu0 %v204
  %857 = vmatprep.subr.mxu0 %v192
  %858 = vmatpush1.msra.mxu0 %v191
  %859 = vmatprep.subr.mxu0 %v179
  %860 = vmatpush1.msra.mxu0 %v178
  %861 = vmatprep.subr.mxu0 %v166
  %862 = vmatpush1.msra.mxu0 %v165
  %863 = vmatprep.subr.mxu0 %v153
  %864 = vmatpush1.msra.mxu0 %v152
  %865 = vmatprep.subr.mxu0 %v140
  %866 = vmatpush1.msra.mxu0 %v139
  %867 = vmatprep.subr.mxu0 %v127
  %868 = vmatpush1.msra.mxu0 %v126
  %869 = vmatprep.subr.mxu0 %v114
  %870 = vmatpush1.msra.mxu0 %v113
  %871 = vmatprep.subr.mxu0 %v101
  %872 = vmatpush1.msra.mxu0 %v100
  %873 = vmatprep.subr.mxu0 %v88
  %874 = vmatpush1.msra.mxu0 %v87
  %875 = vmatprep.subr.mxu0 %v75
  %876 = vmatpush1.msra.mxu0 %v74
  %877 = vmatprep.subr.mxu0 %v62
  %878 = vmatpush1.msra.mxu0 %v61
  %879 = vmatprep.subr.mxu0 %v49
  %880 = vmatpush1.msra.mxu0 %v48
  %881 = vmatprep.subr.mxu0 %v36
  %882 = vmatpush1.msra.mxu0 %v35
  %883 = vmatprep.subr.mxu0 0.0
  %884 = vmatpush2.msra.mxu0 0.0
  %885 = vmatprep.subr.mxu0 0.0
  %886 = vmatpush2.msra.mxu0 0.0
  %887 = vmatprep.subr.mxu0 0.0
  %888 = vmatpush2.msra.mxu0 0.0
  %889 = vmatprep.subr.mxu0 0.0
  %890 = vmatpush2.msra.mxu0 0.0
  %891 = vmatprep.subr.mxu0 0.0
  %892 = vmatpush2.msra.mxu0 0.0
  %893 = vmatprep.subr.mxu0 0.0
  %894 = vmatpush2.msra.mxu0 0.0
  %895 = vmatprep.subr.mxu0 0.0
  %896 = vmatpush2.msra.mxu0 0.0
  %897 = vmatprep.subr.mxu0 %v461
  %898 = vmatpush2.msra.mxu0 %v458
  %899 = vmatprep.subr.mxu0 %v335
  %900 = vmatpush2.msra.mxu0 %v334
  %901 = vmatprep.subr.mxu0 %v322
  %902 = vmatpush2.msra.mxu0 %v321
  %903 = vmatprep.subr.mxu0 %v309
  %904 = vmatpush2.msra.mxu0 %v308
  %905 = vmatprep.subr.mxu0 %v296
  %906 = vmatpush2.msra.mxu0 %v295
  %907 = vmatprep.subr.mxu0 %v283
  %908 = vmatpush2.msra.mxu0 %v282
  %909 = vmatprep.subr.mxu0 %v270
  %910 = vmatpush2.msra.mxu0 %v269
  %911 = vmatprep.subr.mxu0 %v257
  %912 = vmatpush2.msra.mxu0 %v256
  %913 = vmatprep.subr.mxu0 %v244
  %914 = vmatpush2.msra.mxu0 %v243
  %915 = vmatprep.mubr.f32.mxu0 %v421
  %916 = vmatmul.mubr.f32.gmra.mxu0 %v21
  %v917 = vpop.f32.mrf.mxu0
  %v918 = vadd.f32 %v397, %v917
  %v919 = vpop.f32.mrf.mxu0
  %v920 = vadd.f32 %v401, %v919
  %921 = vmatprep.mubr.f32.mxu0 %v424
  %922 = vmatmul.mubr.f32.gmra.mxu0 %v23
  %v923 = vpop.f32.mrf.mxu0
  %v924 = vadd.f32 %v397, %v923
  %v925 = vpop.f32.mrf.mxu0
  %v926 = vadd.f32 %v401, %v925
  %927 = vdwg.mxu0
  %928 = vmatprep.subr.mxu0 0.0
  %929 = vmatpush1.msra.mxu0 %v232
  %930 = vmatprep.subr.mxu0 0.0
  %931 = vmatpush1.msra.mxu0 %v219
  %932 = vmatprep.subr.mxu0 0.0
  %933 = vmatpush1.msra.mxu0 %v206
  %934 = vmatprep.subr.mxu0 0.0
  %935 = vmatpush1.msra.mxu0 %v193
  %936 = vmatprep.subr.mxu0 0.0
  %937 = vmatpush1.msra.mxu0 %v180
  %938 = vmatprep.subr.mxu0 0.0
  %939 = vmatpush1.msra.mxu0 %v167
  %940 = vmatprep.subr.mxu0 0.0
  %941 = vmatpush1.msra.mxu0 %v154
  %942 = vmatprep.subr.mxu0 0.0
  %943 = vmatpush1.msra.mxu0 %v141
  %944 = vmatprep.subr.mxu0 0.0
  %945 = vmatpush1.msra.mxu0 %v128
  %946 = vmatprep.subr.mxu0 0.0
  %947 = vmatpush1.msra.mxu0 %v115
  %948 = vmatprep.subr.mxu0 0.0
  %949 = vmatpush1.msra.mxu0 %v102
  %950 = vmatprep.subr.mxu0 0.0
  %951 = vmatpush1.msra.mxu0 %v89
  %952 = vmatprep.subr.mxu0 0.0
  %953 = vmatpush1.msra.mxu0 %v76
  %954 = vmatprep.subr.mxu0 0.0
  %955 = vmatpush1.msra.mxu0 %v63
  %956 = vmatprep.subr.mxu0 0.0
  %957 = vmatpush1.msra.mxu0 %v50
  %958 = vmatprep.subr.mxu0 0.0
  %959 = vmatpush1.msra.mxu0 %v37
  %960 = vmatprep.subr.mxu0 0.0
  %961 = vmatpush2.msra.mxu0 0.0
  %962 = vmatprep.subr.mxu0 0.0
  %963 = vmatpush2.msra.mxu0 0.0
  %964 = vmatprep.subr.mxu0 0.0
  %965 = vmatpush2.msra.mxu0 0.0
  %966 = vmatprep.subr.mxu0 0.0
  %967 = vmatpush2.msra.mxu0 0.0
  %968 = vmatprep.subr.mxu0 0.0
  %969 = vmatpush2.msra.mxu0 0.0
  %970 = vmatprep.subr.mxu0 0.0
  %971 = vmatpush2.msra.mxu0 0.0
  %972 = vmatprep.subr.mxu0 0.0
  %973 = vmatpush2.msra.mxu0 0.0
  %974 = vmatprep.subr.mxu0 0.0
  %975 = vmatpush2.msra.mxu0 %v464
  %976 = vmatprep.subr.mxu0 0.0
  %977 = vmatpush2.msra.mxu0 %v336
  %978 = vmatprep.subr.mxu0 0.0
  %979 = vmatpush2.msra.mxu0 %v323
  %980 = vmatprep.subr.mxu0 0.0
  %981 = vmatpush2.msra.mxu0 %v310
  %982 = vmatprep.subr.mxu0 0.0
  %983 = vmatpush2.msra.mxu0 %v297
  %984 = vmatprep.subr.mxu0 0.0
  %985 = vmatpush2.msra.mxu0 %v284
  %986 = vmatprep.subr.mxu0 0.0
  %987 = vmatpush2.msra.mxu0 %v271
  %988 = vmatprep.subr.mxu0 0.0
  %989 = vmatpush2.msra.mxu0 %v258
  %990 = vmatprep.subr.mxu0 0.0
  %991 = vmatpush2.msra.mxu0 %v245
  %992 = vmatprep.mubr.f32.mxu0 %v421
  %993 = vmatmul.mubr.f32.gmra.mxu0 %v21
  %v994 = vpop.f32.mrf.mxu0
  %v995 = vadd.f32 %v405, %v994
  %v996 = vpop.f32.mrf.mxu0
  %997 = vmatprep.mubr.f32.mxu0 %v424
  %998 = vmatmul.mubr.f32.gmra.mxu0 %v23
  %v999 = vpop.f32.mrf.mxu0
  %v1000 = vadd.f32 %v405, %v999
  %v1001 = vpop.f32.mrf.mxu0
  %1002 = vdwg.mxu0
  %v1003 = vld [vmem:[%s3] sm:$0xff]
  %v1004 = vld [vmem:[%s3 + $0x8] sm:$0xff]
  %v1005 = vld [vmem:[%s3 + $0x10] sm:$0xff]
  %v1006 = vld [vmem:[%s3 + $0x18] sm:$0xff]
  %v1007 = vld [vmem:[%s3 + $0x20] sm:$0xff]
  %v1008 = vld [vmem:[%s3 + $0x28] sm:$0xff]
  %v1009 = vld [vmem:[%s3 + $0x30] sm:$0xff]
  %v1010 = vld [vmem:[%s3 + $0x38] sm:$0xff]
  %v1011 = vld [vmem:[%s3 + $0x40] sm:$0xff]
  %v1012 = vld [vmem:[%s3 + $0x48] sm:$0xff]
  %v1013 = vld [vmem:[%s3 + $0x50] sm:$0xff]
  %v1014 = vld [vmem:[%s3 + $0x58] sm:$0xff]
  %v1015 = vld [vmem:[%s3 + $0x60] sm:$0xff]
  %v1016 = vld [vmem:[%s3 + $0x68] sm:$0xff]
  %v1017 = vld [vmem:[%s3 + $0x70] sm:$0xff]
  %v1018 = vld [vmem:[%s3 + $0x78] sm:$0xff]
  %v1019 = vld [vmem:[%s3 + $0x80] sm:$0xff]
  %v1020 = vld [vmem:[%s3 + $0x88] sm:$0xff]
  %v1021 = vld [vmem:[%s3 + $0x90] sm:$0xff]
  %v1022 = vld [vmem:[%s3 + $0x98] sm:$0xff]
  %v1023 = vld [vmem:[%s3 + $0xa0] sm:$0xff]
  %v1024 = vld [vmem:[%s3 + $0xa8] sm:$0xff]
  %v1025 = vld [vmem:[%s3 + $0xb0] sm:$0xff]
  %v1026 = vld [vmem:[%s3 + $0xb8] sm:$0xff]
  %v1027 = vld [vmem:[%s3 + $0xc0] sm:$0xff]
  %v1028 = vld [vmem:[%s3 + $0xc8] sm:$0xff]
  %v1029 = vld [vmem:[%s3 + $0xd0] sm:$0xff]
  %v1030 = vld [vmem:[%s3 + $0xd8] sm:$0xff]
  %v1031 = vld [vmem:[%s3 + $0xe0] sm:$0xff]
  %v1032 = vld [vmem:[%s3 + $0xe8] sm:$0xff]
  %v1033 = vld [vmem:[%s3 + $0xf0] sm:$0xff]
  %v1034 = vld [vmem:[%s3 + $0xf8] sm:$0xff]
  %v1035 = vld [vmem:[%s3 + $0x100] sm:$0xff]
  %v1036 = vld [vmem:[%s3 + $0x108] sm:$0xff]
  %v1037 = vld [vmem:[%s3 + $0x110] sm:$0xff]
  %v1038 = vld [vmem:[%s3 + $0x118] sm:$0xff]
  %v1039 = vld [vmem:[%s3 + $0x120] sm:$0xff]
  %v1040 = vld [vmem:[%s3 + $0x128] sm:$0xff]
  %v1041 = vld [vmem:[%s3 + $0x130] sm:$0xff]
  %v1042 = vld [vmem:[%s3 + $0x138] sm:$0xff]
  %v1043 = vld [vmem:[%s3 + $0x140] sm:$0xff]
  %v1044 = vld [vmem:[%s3 + $0x148] sm:$0xff]
  %v1045 = vld [vmem:[%s3 + $0x150] sm:$0xff]
  %v1046 = vld [vmem:[%s3 + $0x158] sm:$0xff]
  %v1047 = vld [vmem:[%s3 + $0x160] sm:$0xff]
  %v1048 = vld [vmem:[%s3 + $0x168] sm:$0xff]
  %v1049 = vld [vmem:[%s3 + $0x170] sm:$0xff]
  %v1050 = vld [vmem:[%s3 + $0x178] sm:$0xff]
  %v1051 = vld [vmem:[%s3 + $0x180] sm:$0xff]
  %v1052 = vld [vmem:[%s3 + $0x188] sm:$0xff]
  %v1053 = vld [vmem:[%s3 + $0x190] sm:$0xff]
  %v1054 = vld [vmem:[%s3 + $0x198] sm:$0xff]
  %v1055 = vld [vmem:[%s3 + $0x1a0] sm:$0xff]
  %v1056 = vld [vmem:[%s3 + $0x1a8] sm:$0xff]
  %v1057 = vld [vmem:[%s3 + $0x1b0] sm:$0xff]
  %v1058 = vld [vmem:[%s3 + $0x1b8] sm:$0xff]
  %v1059 = vld [vmem:[%s3 + $0x1c0] sm:$0xff]
  %v1060 = vld [vmem:[%s3 + $0x1c8] sm:$0xff]
  %v1061 = vld [vmem:[%s3 + $0x1d0] sm:$0xff]
  %v1062 = vld [vmem:[%s3 + $0x1d8] sm:$0xff]
  %v1063 = vld [vmem:[%s3 + $0x1e0] sm:$0xff]
  %v1064 = vld [vmem:[%s3 + $0x1e8] sm:$0xff]
  %v1065 = vld [vmem:[%s3 + $0x1f0] sm:$0xff]
  %v1066 = vld [vmem:[%s3 + $0x1f8] sm:$0xff]
  %v1067 = vld [vmem:[%s3 + $0x200] sm:$0xff]
  %v1068 = vld [vmem:[%s3 + $0x208] sm:$0xff]
  %v1069 = vld [vmem:[%s3 + $0x210] sm:$0xff]
  %v1070 = vld [vmem:[%s3 + $0x218] sm:$0xff]
  %v1071 = vld [vmem:[%s3 + $0x220] sm:$0xff]
  %v1072 = vld [vmem:[%s3 + $0x228] sm:$0xff]
  %v1073 = vld [vmem:[%s3 + $0x230] sm:$0xff]
  %v1074 = vld [vmem:[%s3 + $0x238] sm:$0xff]
  %v1075 = vld [vmem:[%s3 + $0x240] sm:$0xff]
  %v1076 = vld [vmem:[%s3 + $0x248] sm:$0xff]
  %v1077 = vld [vmem:[%s3 + $0x250] sm:$0xff]
  %v1078 = vld [vmem:[%s3 + $0x258] sm:$0xff]
  %v1079 = vld [vmem:[%s3 + $0x260] sm:$0xff]
  %v1080 = vld [vmem:[%s3 + $0x268] sm:$0xff]
  %v1081 = vld [vmem:[%s3 + $0x270] sm:$0xff]
  %v1082 = vld [vmem:[%s3 + $0x278] sm:$0xff]
  %v1083 = vld [vmem:[%s3 + $0x280] sm:$0xff]
  %v1084 = vld [vmem:[%s3 + $0x288] sm:$0xff]
  %v1085 = vld [vmem:[%s3 + $0x290] sm:$0xff]
  %v1086 = vld [vmem:[%s3 + $0x298] sm:$0xff]
  %v1087 = vld [vmem:[%s3 + $0x2a0] sm:$0xff]
  %v1088 = vld [vmem:[%s3 + $0x2a8] sm:$0xff]
  %v1089 = vld [vmem:[%s3 + $0x2b0] sm:$0xff]
  %v1090 = vld [vmem:[%s3 + $0x2b8] sm:$0xff]
  %v1091 = vld [vmem:[%s3 + $0x2c0] sm:$0xff]
  %v1092 = vld [vmem:[%s3 + $0x2c8] sm:$0xff]
  %v1093 = vld [vmem:[%s3 + $0x2d0] sm:$0xff]
  %v1094 = vld [vmem:[%s3 + $0x2d8] sm:$0xff]
  %v1095 = vld [vmem:[%s3 + $0x2e0] sm:$0xff]
  %v1096 = vld [vmem:[%s3 + $0x2e8] sm:$0xff]
  %v1097 = vld [vmem:[%s3 + $0x2f0] sm:$0xff]
  %v1098 = vld [vmem:[%s3 + $0x2f8] sm:$0xff]
  %v1099 = vld [vmem:[%s3 + $0x300] sm:$0xff]
  %v1100 = vld [vmem:[%s3 + $0x308] sm:$0xff]
  %v1101 = vld [vmem:[%s3 + $0x310] sm:$0xff]
  %v1102 = vld [vmem:[%s3 + $0x318] sm:$0xff]
  %v1103 = vld [vmem:[%s3 + $0x320] sm:$0xff]
  %v1104 = vld [vmem:[%s3 + $0x328] sm:$0xff]
  %v1105 = vld [vmem:[%s3 + $0x330] sm:$0xff]
  %v1106 = vld [vmem:[%s3 + $0x338] sm:$0xff]
  %v1107 = vld [vmem:[%s3 + $0x340] sm:$0xff]
  %v1108 = vld [vmem:[%s3 + $0x348] sm:$0xff]
  %v1109 = vld [vmem:[%s3 + $0x350] sm:$0xff]
  %v1110 = vld [vmem:[%s3 + $0x358] sm:$0xff]
  %v1111 = vld [vmem:[%s3 + $0x360] sm:$0xff]
  %v1112 = vld [vmem:[%s3 + $0x368] sm:$0xff]
  %v1113 = vld [vmem:[%s3 + $0x370] sm:$0xff]
  %v1114 = vld [vmem:[%s3 + $0x378] sm:$0xff]
  %v1115 = vld [vmem:[%s3 + $0x380] sm:$0xff]
  %v1116 = vld [vmem:[%s3 + $0x388] sm:$0xff]
  %v1117 = vld [vmem:[%s3 + $0x390] sm:$0xff]
  %v1118 = vld [vmem:[%s3 + $0x398] sm:$0xff]
  %v1119 = vld [vmem:[%s3 + $0x3a0] sm:$0xff]
  %v1120 = vld [vmem:[%s3 + $0x3a8] sm:$0xff]
  %v1121 = vld [vmem:[%s3 + $0x3b0] sm:$0xff]
  %v1122 = vld [vmem:[%s3 + $0x3b8] sm:$0xff]
  %v1123 = vld [vmem:[%s3 + $0x3c0] sm:$0xff]
  %v1124 = vld [vmem:[%s3 + $0x3c8] sm:$0xff]
  %v1125 = vld [vmem:[%s3 + $0x3d0] sm:$0xff]
  %v1126 = vld [vmem:[%s3 + $0x3d8] sm:$0xff]
  %v1127 = vld [vmem:[%s3 + $0x3e0] sm:$0xff]
  %v1128 = vld [vmem:[%s3 + $0x3e8] sm:$0xff]
  %v1129 = vld [vmem:[%s3 + $0x3f0] sm:$0xff]
  %v1130 = vld [vmem:[%s3 + $0x3f8] sm:$0xff]
  %v1131 = vld [vmem:[%s3 + $0x400] sm:$0xff]
  %v1132 = vld [vmem:[%s3 + $0x408] sm:$0xff]
  %v1133 = vld [vmem:[%s3 + $0x410] sm:$0xff]
  %v1134 = vld [vmem:[%s3 + $0x418] sm:$0xff]
  %v1135 = vld [vmem:[%s3 + $0x420] sm:$0xff]
  %v1136 = vld [vmem:[%s3 + $0x428] sm:$0xff]
  %v1137 = vld [vmem:[%s3 + $0x430] sm:$0xff]
  %v1138 = vld [vmem:[%s3 + $0x438] sm:$0xff]
  %v1139 = vld [vmem:[%s3 + $0x440] sm:$0xff]
  %v1140 = vld [vmem:[%s3 + $0x448] sm:$0xff]
  %v1141 = vld [vmem:[%s3 + $0x450] sm:$0xff]
  %v1142 = vld [vmem:[%s3 + $0x458] sm:$0xff]
  %v1143 = vld [vmem:[%s3 + $0x460] sm:$0xff]
  %v1144 = vld [vmem:[%s3 + $0x468] sm:$0xff]
  %v1145 = vld [vmem:[%s3 + $0x470] sm:$0xff]
  %v1146 = vld [vmem:[%s3 + $0x478] sm:$0xff]
  %v1147 = vld [vmem:[%s3 + $0x480] sm:$0xff]
  %v1148 = vld [vmem:[%s3 + $0x488] sm:$0xff]
  %v1149 = vld [vmem:[%s3 + $0x490] sm:$0xff]
  %v1150 = vld [vmem:[%s3 + $0x498] sm:$0xff]
  %v1151 = vld [vmem:[%s3 + $0x4a0] sm:$0xff]
  %v1152 = vld [vmem:[%s3 + $0x4a8] sm:$0xff]
  %v1153 = vld [vmem:[%s3 + $0x4b0] sm:$0xff]
  %v1154 = vld [vmem:[%s3 + $0x4b8] sm:$0xff]
  %v1155 = vld [vmem:[%s3 + $0x4c0] sm:$0xff]
  %v1156 = vld [vmem:[%s3 + $0x4c8] sm:$0xff]
  %v1157 = vld [vmem:[%s3 + $0x4d0] sm:$0xff]
  %v1158 = vld [vmem:[%s3 + $0x4d8] sm:$0xff]
  %v1159 = vld [vmem:[%s3 + $0x4e0] sm:$0xff]
  %v1160 = vld [vmem:[%s3 + $0x4e8] sm:$0xff]
  %v1161 = vld [vmem:[%s3 + $0x4f0] sm:$0xff]
  %v1162 = vld [vmem:[%s3 + $0x4f8] sm:$0xff]
  %v1163 = vld [vmem:[%s3 + $0x500] sm:$0xff]
  %v1164 = vld [vmem:[%s3 + $0x508] sm:$0xff]
  %v1165 = vld [vmem:[%s3 + $0x510] sm:$0xff]
  %v1166 = vld [vmem:[%s3 + $0x518] sm:$0xff]
  %v1167 = vld [vmem:[%s3 + $0x520] sm:$0xff]
  %v1168 = vld [vmem:[%s3 + $0x528] sm:$0xff]
  %v1169 = vld [vmem:[%s3 + $0x530] sm:$0xff]
  %v1170 = vld [vmem:[%s3 + $0x538] sm:$0xff]
  %v1171 = vld [vmem:[%s3 + $0x540] sm:$0xff]
  %v1172 = vld [vmem:[%s3 + $0x548] sm:$0xff]
  %v1173 = vld [vmem:[%s3 + $0x550] sm:$0xff]
  %v1174 = vld [vmem:[%s3 + $0x558] sm:$0xff]
  %v1175 = vld [vmem:[%s3 + $0x560] sm:$0xff]
  %v1176 = vld [vmem:[%s3 + $0x568] sm:$0xff]
  %v1177 = vld [vmem:[%s3 + $0x570] sm:$0xff]
  %v1178 = vld [vmem:[%s3 + $0x578] sm:$0xff]
  %v1179 = vld [vmem:[%s3 + $0x580] sm:$0xff]
  %v1180 = vld [vmem:[%s3 + $0x588] sm:$0xff]
  %v1181 = vld [vmem:[%s3 + $0x590] sm:$0xff]
  %v1182 = vld [vmem:[%s3 + $0x598] sm:$0xff]
  %v1183 = vld [vmem:[%s3 + $0x5a0] sm:$0xff]
  %v1184 = vld [vmem:[%s3 + $0x5a8] sm:$0xff]
  %v1185 = vld [vmem:[%s3 + $0x5b0] sm:$0xff]
  %v1186 = vld [vmem:[%s3 + $0x5b8] sm:$0xff]
  %v1187 = vld [vmem:[%s3 + $0x5c0] sm:$0xff]
  %v1188 = vld [vmem:[%s3 + $0x5c8] sm:$0xff]
  %v1189 = vld [vmem:[%s3 + $0x5d0] sm:$0xff]
  %v1190 = vld [vmem:[%s3 + $0x5d8] sm:$0xff]
  %v1191 = vld [vmem:[%s3 + $0x5e0] sm:$0xff]
  %v1192 = vld [vmem:[%s3 + $0x5e8] sm:$0xff]
  %v1193 = vld [vmem:[%s3 + $0x5f0] sm:$0xff]
  %v1194 = vld [vmem:[%s3 + $0x5f8] sm:$0xff]
  %v1195 = vld [vmem:[%s3 + $0x600] sm:$0xff]
  %v1196 = vld [vmem:[%s3 + $0x608] sm:$0xff]
  %v1197 = vld [vmem:[%s3 + $0x610] sm:$0xff]
  %v1198 = vld [vmem:[%s3 + $0x618] sm:$0xff]
  %s1199 = sld [smem:[#allocation2]]
  %v1200 = vstv %s1199
  %vm1201 = vcmask 261120
  %v1203 = vsel %vm1201, %v995, 0
  %v1206 = vsel %vm1201, %v1000, 0
  %1208 = vmatprep.subr.mxu0 0.0
  %1209 = vmatpush1.msra.mxu0 %v1018
  %1210 = vmatprep.subr.mxu0 0.0
  %1211 = vmatpush1.msra.mxu0 %v1017
  %1212 = vmatprep.subr.mxu0 0.0
  %1213 = vmatpush1.msra.mxu0 %v1016
  %1214 = vmatprep.subr.mxu0 0.0
  %1215 = vmatpush1.msra.mxu0 %v1015
  %1216 = vmatprep.subr.mxu0 0.0
  %1217 = vmatpush1.msra.mxu0 %v1014
  %1218 = vmatprep.subr.mxu0 0.0
  %1219 = vmatpush1.msra.mxu0 %v1013
  %1220 = vmatprep.subr.mxu0 0.0
  %1221 = vmatpush1.msra.mxu0 %v1012
  %1222 = vmatprep.subr.mxu0 0.0
  %1223 = vmatpush1.msra.mxu0 %v1011
  %1224 = vmatprep.subr.mxu0 0.0
  %1225 = vmatpush1.msra.mxu0 %v1010
  %1226 = vmatprep.subr.mxu0 0.0
  %1227 = vmatpush1.msra.mxu0 %v1009
  %1228 = vmatprep.subr.mxu0 0.0
  %1229 = vmatpush1.msra.mxu0 %v1008
  %1230 = vmatprep.subr.mxu0 0.0
  %1231 = vmatpush1.msra.mxu0 %v1007
  %1232 = vmatprep.subr.mxu0 0.0
  %1233 = vmatpush1.msra.mxu0 %v1006
  %1234 = vmatprep.subr.mxu0 0.0
  %1235 = vmatpush1.msra.mxu0 %v1005
  %1236 = vmatprep.subr.mxu0 0.0
  %1237 = vmatpush1.msra.mxu0 %v1004
  %1238 = vmatprep.subr.mxu0 0.0
  %1239 = vmatpush1.msra.mxu0 %v1003
  %1240 = vmatprep.subr.mxu0 0.0
  %1241 = vmatpush2.msra.mxu0 %v1034
  %1242 = vmatprep.subr.mxu0 0.0
  %1243 = vmatpush2.msra.mxu0 %v1033
  %1244 = vmatprep.subr.mxu0 0.0
  %1245 = vmatpush2.msra.mxu0 %v1032
  %1246 = vmatprep.subr.mxu0 0.0
  %1247 = vmatpush2.msra.mxu0 %v1031
  %1248 = vmatprep.subr.mxu0 0.0
  %1249 = vmatpush2.msra.mxu0 %v1030
  %1250 = vmatprep.subr.mxu0 0.0
  %1251 = vmatpush2.msra.mxu0 %v1029
  %1252 = vmatprep.subr.mxu0 0.0
  %1253 = vmatpush2.msra.mxu0 %v1028
  %1254 = vmatprep.subr.mxu0 0.0
  %1255 = vmatpush2.msra.mxu0 %v1027
  %1256 = vmatprep.subr.mxu0 0.0
  %1257 = vmatpush2.msra.mxu0 %v1026
  %1258 = vmatprep.subr.mxu0 0.0
  %1259 = vmatpush2.msra.mxu0 %v1025
  %1260 = vmatprep.subr.mxu0 0.0
  %1261 = vmatpush2.msra.mxu0 %v1024
  %1262 = vmatprep.subr.mxu0 0.0
  %1263 = vmatpush2.msra.mxu0 %v1023
  %1264 = vmatprep.subr.mxu0 0.0
  %1265 = vmatpush2.msra.mxu0 %v1022
  %1266 = vmatprep.subr.mxu0 0.0
  %1267 = vmatpush2.msra.mxu0 %v1021
  %1268 = vmatprep.subr.mxu0 0.0
  %1269 = vmatpush2.msra.mxu0 %v1020
  %1270 = vmatprep.subr.mxu0 0.0
  %1271 = vmatpush2.msra.mxu0 %v1019
  %1272 = vmatprep.mubr.f32.mxu0 %v535
  %1273 = vmatmul.mubr.f32.gmra.mxu0 %v533
  %v1274 = vpop.f32.mrf.mxu0
  %v1275 = vadd.f32 %v1200, %v1274
  %v1276 = vpop.f32.mrf.mxu0
  %1277 = vmatprep.mubr.f32.mxu0 %v541
  %1278 = vmatmul.mubr.f32.gmra.mxu0 %v539
  %v1279 = vpop.f32.mrf.mxu0
  %v1280 = vadd.f32 %v1200, %v1279
  %v1281 = vpop.f32.mrf.mxu0
  %1282 = vdwg.mxu0
  %1283 = vmatprep.subr.mxu0 0.0
  %1284 = vmatpush1.msra.mxu0 %v1050
  %1285 = vmatprep.subr.mxu0 0.0
  %1286 = vmatpush1.msra.mxu0 %v1049
  %1287 = vmatprep.subr.mxu0 0.0
  %1288 = vmatpush1.msra.mxu0 %v1048
  %1289 = vmatprep.subr.mxu0 0.0
  %1290 = vmatpush1.msra.mxu0 %v1047
  %1291 = vmatprep.subr.mxu0 0.0
  %1292 = vmatpush1.msra.mxu0 %v1046
  %1293 = vmatprep.subr.mxu0 0.0
  %1294 = vmatpush1.msra.mxu0 %v1045
  %1295 = vmatprep.subr.mxu0 0.0
  %1296 = vmatpush1.msra.mxu0 %v1044
  %1297 = vmatprep.subr.mxu0 0.0
  %1298 = vmatpush1.msra.mxu0 %v1043
  %1299 = vmatprep.subr.mxu0 0.0
  %1300 = vmatpush1.msra.mxu0 %v1042
  %1301 = vmatprep.subr.mxu0 0.0
  %1302 = vmatpush1.msra.mxu0 %v1041
  %1303 = vmatprep.subr.mxu0 0.0
  %1304 = vmatpush1.msra.mxu0 %v1040
  %1305 = vmatprep.subr.mxu0 0.0
  %1306 = vmatpush1.msra.mxu0 %v1039
  %1307 = vmatprep.subr.mxu0 0.0
  %1308 = vmatpush1.msra.mxu0 %v1038
  %1309 = vmatprep.subr.mxu0 0.0
  %1310 = vmatpush1.msra.mxu0 %v1037
  %1311 = vmatprep.subr.mxu0 0.0
  %1312 = vmatpush1.msra.mxu0 %v1036
  %1313 = vmatprep.subr.mxu0 0.0
  %1314 = vmatpush1.msra.mxu0 %v1035
  %1315 = vmatprep.subr.mxu0 0.0
  %1316 = vmatpush2.msra.mxu0 %v1066
  %1317 = vmatprep.subr.mxu0 0.0
  %1318 = vmatpush2.msra.mxu0 %v1065
  %1319 = vmatprep.subr.mxu0 0.0
  %1320 = vmatpush2.msra.mxu0 %v1064
  %1321 = vmatprep.subr.mxu0 0.0
  %1322 = vmatpush2.msra.mxu0 %v1063
  %1323 = vmatprep.subr.mxu0 0.0
  %1324 = vmatpush2.msra.mxu0 %v1062
  %1325 = vmatprep.subr.mxu0 0.0
  %1326 = vmatpush2.msra.mxu0 %v1061
  %1327 = vmatprep.subr.mxu0 0.0
  %1328 = vmatpush2.msra.mxu0 %v1060
  %1329 = vmatprep.subr.mxu0 0.0
  %1330 = vmatpush2.msra.mxu0 %v1059
  %1331 = vmatprep.subr.mxu0 0.0
  %1332 = vmatpush2.msra.mxu0 %v1058
  %1333 = vmatprep.subr.mxu0 0.0
  %1334 = vmatpush2.msra.mxu0 %v1057
  %1335 = vmatprep.subr.mxu0 0.0
  %1336 = vmatpush2.msra.mxu0 %v1056
  %1337 = vmatprep.subr.mxu0 0.0
  %1338 = vmatpush2.msra.mxu0 %v1055
  %1339 = vmatprep.subr.mxu0 0.0
  %1340 = vmatpush2.msra.mxu0 %v1054
  %1341 = vmatprep.subr.mxu0 0.0
  %1342 = vmatpush2.msra.mxu0 %v1053
  %1343 = vmatprep.subr.mxu0 0.0
  %1344 = vmatpush2.msra.mxu0 %v1052
  %1345 = vmatprep.subr.mxu0 0.0
  %1346 = vmatpush2.msra.mxu0 %v1051
  %1347 = vmatprep.mubr.f32.mxu0 %v612
  %1348 = vmatmul.mubr.f32.gmra.mxu0 %v610
  %v1349 = vpop.f32.mrf.mxu0
  %v1350 = vadd.f32 %v1275, %v1349
  %v1351 = vpop.f32.mrf.mxu0
  %1352 = vmatprep.mubr.f32.mxu0 %v618
  %1353 = vmatmul.mubr.f32.gmra.mxu0 %v616
  %v1354 = vpop.f32.mrf.mxu0
  %v1355 = vadd.f32 %v1280, %v1354
  %v1356 = vpop.f32.mrf.mxu0
  %1357 = vdwg.mxu0
  %1358 = vmatprep.subr.mxu0 0.0
  %1359 = vmatpush1.msra.mxu0 %v1082
  %1360 = vmatprep.subr.mxu0 0.0
  %1361 = vmatpush1.msra.mxu0 %v1081
  %1362 = vmatprep.subr.mxu0 0.0
  %1363 = vmatpush1.msra.mxu0 %v1080
  %1364 = vmatprep.subr.mxu0 0.0
  %1365 = vmatpush1.msra.mxu0 %v1079
  %1366 = vmatprep.subr.mxu0 0.0
  %1367 = vmatpush1.msra.mxu0 %v1078
  %1368 = vmatprep.subr.mxu0 0.0
  %1369 = vmatpush1.msra.mxu0 %v1077
  %1370 = vmatprep.subr.mxu0 0.0
  %1371 = vmatpush1.msra.mxu0 %v1076
  %1372 = vmatprep.subr.mxu0 0.0
  %1373 = vmatpush1.msra.mxu0 %v1075
  %1374 = vmatprep.subr.mxu0 0.0
  %1375 = vmatpush1.msra.mxu0 %v1074
  %1376 = vmatprep.subr.mxu0 0.0
  %1377 = vmatpush1.msra.mxu0 %v1073
  %1378 = vmatprep.subr.mxu0 0.0
  %1379 = vmatpush1.msra.mxu0 %v1072
  %1380 = vmatprep.subr.mxu0 0.0
  %1381 = vmatpush1.msra.mxu0 %v1071
  %1382 = vmatprep.subr.mxu0 0.0
  %1383 = vmatpush1.msra.mxu0 %v1070
  %1384 = vmatprep.subr.mxu0 0.0
  %1385 = vmatpush1.msra.mxu0 %v1069
  %1386 = vmatprep.subr.mxu0 0.0
  %1387 = vmatpush1.msra.mxu0 %v1068
  %1388 = vmatprep.subr.mxu0 0.0
  %1389 = vmatpush1.msra.mxu0 %v1067
  %1390 = vmatprep.subr.mxu0 0.0
  %1391 = vmatpush2.msra.mxu0 %v1098
  %1392 = vmatprep.subr.mxu0 0.0
  %1393 = vmatpush2.msra.mxu0 %v1097
  %1394 = vmatprep.subr.mxu0 0.0
  %1395 = vmatpush2.msra.mxu0 %v1096
  %1396 = vmatprep.subr.mxu0 0.0
  %1397 = vmatpush2.msra.mxu0 %v1095
  %1398 = vmatprep.subr.mxu0 0.0
  %1399 = vmatpush2.msra.mxu0 %v1094
  %1400 = vmatprep.subr.mxu0 0.0
  %1401 = vmatpush2.msra.mxu0 %v1093
  %1402 = vmatprep.subr.mxu0 0.0
  %1403 = vmatpush2.msra.mxu0 %v1092
  %1404 = vmatprep.subr.mxu0 0.0
  %1405 = vmatpush2.msra.mxu0 %v1091
  %1406 = vmatprep.subr.mxu0 0.0
  %1407 = vmatpush2.msra.mxu0 %v1090
  %1408 = vmatprep.subr.mxu0 0.0
  %1409 = vmatpush2.msra.mxu0 %v1089
  %1410 = vmatprep.subr.mxu0 0.0
  %1411 = vmatpush2.msra.mxu0 %v1088
  %1412 = vmatprep.subr.mxu0 0.0
  %1413 = vmatpush2.msra.mxu0 %v1087
  %1414 = vmatprep.subr.mxu0 0.0
  %1415 = vmatpush2.msra.mxu0 %v1086
  %1416 = vmatprep.subr.mxu0 0.0
  %1417 = vmatpush2.msra.mxu0 %v1085
  %1418 = vmatprep.subr.mxu0 0.0
  %1419 = vmatpush2.msra.mxu0 %v1084
  %1420 = vmatprep.subr.mxu0 0.0
  %1421 = vmatpush2.msra.mxu0 %v1083
  %1422 = vmatprep.mubr.f32.mxu0 %v689
  %1423 = vmatmul.mubr.f32.gmra.mxu0 %v687
  %v1424 = vpop.f32.mrf.mxu0
  %v1425 = vadd.f32 %v1350, %v1424
  %v1426 = vpop.f32.mrf.mxu0
  %1427 = vmatprep.mubr.f32.mxu0 %v695
  %1428 = vmatmul.mubr.f32.gmra.mxu0 %v693
  %v1429 = vpop.f32.mrf.mxu0
  %v1430 = vadd.f32 %v1355, %v1429
  %v1431 = vpop.f32.mrf.mxu0
  %1432 = vdwg.mxu0
  %1433 = vmatprep.subr.mxu0 0.0
  %1434 = vmatpush1.msra.mxu0 %v1114
  %1435 = vmatprep.subr.mxu0 0.0
  %1436 = vmatpush1.msra.mxu0 %v1113
  %1437 = vmatprep.subr.mxu0 0.0
  %1438 = vmatpush1.msra.mxu0 %v1112
  %1439 = vmatprep.subr.mxu0 0.0
  %1440 = vmatpush1.msra.mxu0 %v1111
  %1441 = vmatprep.subr.mxu0 0.0
  %1442 = vmatpush1.msra.mxu0 %v1110
  %1443 = vmatprep.subr.mxu0 0.0
  %1444 = vmatpush1.msra.mxu0 %v1109
  %1445 = vmatprep.subr.mxu0 0.0
  %1446 = vmatpush1.msra.mxu0 %v1108
  %1447 = vmatprep.subr.mxu0 0.0
  %1448 = vmatpush1.msra.mxu0 %v1107
  %1449 = vmatprep.subr.mxu0 0.0
  %1450 = vmatpush1.msra.mxu0 %v1106
  %1451 = vmatprep.subr.mxu0 0.0
  %1452 = vmatpush1.msra.mxu0 %v1105
  %1453 = vmatprep.subr.mxu0 0.0
  %1454 = vmatpush1.msra.mxu0 %v1104
  %1455 = vmatprep.subr.mxu0 0.0
  %1456 = vmatpush1.msra.mxu0 %v1103
  %1457 = vmatprep.subr.mxu0 0.0
  %1458 = vmatpush1.msra.mxu0 %v1102
  %1459 = vmatprep.subr.mxu0 0.0
  %1460 = vmatpush1.msra.mxu0 %v1101
  %1461 = vmatprep.subr.mxu0 0.0
  %1462 = vmatpush1.msra.mxu0 %v1100
  %1463 = vmatprep.subr.mxu0 0.0
  %1464 = vmatpush1.msra.mxu0 %v1099
  %1465 = vmatprep.subr.mxu0 0.0
  %1466 = vmatpush2.msra.mxu0 %v1130
  %1467 = vmatprep.subr.mxu0 0.0
  %1468 = vmatpush2.msra.mxu0 %v1129
  %1469 = vmatprep.subr.mxu0 0.0
  %1470 = vmatpush2.msra.mxu0 %v1128
  %1471 = vmatprep.subr.mxu0 0.0
  %1472 = vmatpush2.msra.mxu0 %v1127
  %1473 = vmatprep.subr.mxu0 0.0
  %1474 = vmatpush2.msra.mxu0 %v1126
  %1475 = vmatprep.subr.mxu0 0.0
  %1476 = vmatpush2.msra.mxu0 %v1125
  %1477 = vmatprep.subr.mxu0 0.0
  %1478 = vmatpush2.msra.mxu0 %v1124
  %1479 = vmatprep.subr.mxu0 0.0
  %1480 = vmatpush2.msra.mxu0 %v1123
  %1481 = vmatprep.subr.mxu0 0.0
  %1482 = vmatpush2.msra.mxu0 %v1122
  %1483 = vmatprep.subr.mxu0 0.0
  %1484 = vmatpush2.msra.mxu0 %v1121
  %1485 = vmatprep.subr.mxu0 0.0
  %1486 = vmatpush2.msra.mxu0 %v1120
  %1487 = vmatprep.subr.mxu0 0.0
  %1488 = vmatpush2.msra.mxu0 %v1119
  %1489 = vmatprep.subr.mxu0 0.0
  %1490 = vmatpush2.msra.mxu0 %v1118
  %1491 = vmatprep.subr.mxu0 0.0
  %1492 = vmatpush2.msra.mxu0 %v1117
  %1493 = vmatprep.subr.mxu0 0.0
  %1494 = vmatpush2.msra.mxu0 %v1116
  %1495 = vmatprep.subr.mxu0 0.0
  %1496 = vmatpush2.msra.mxu0 %v1115
  %1497 = vmatprep.mubr.f32.mxu0 %v766
  %1498 = vmatmul.mubr.f32.gmra.mxu0 %v764
  %v1499 = vpop.f32.mrf.mxu0
  %v1500 = vadd.f32 %v1425, %v1499
  %v1501 = vpop.f32.mrf.mxu0
  %1502 = vmatprep.mubr.f32.mxu0 %v772
  %1503 = vmatmul.mubr.f32.gmra.mxu0 %v770
  %v1504 = vpop.f32.mrf.mxu0
  %v1505 = vadd.f32 %v1430, %v1504
  %v1506 = vpop.f32.mrf.mxu0
  %1507 = vdwg.mxu0
  %1508 = vmatprep.subr.mxu0 0.0
  %1509 = vmatpush1.msra.mxu0 %v1146
  %1510 = vmatprep.subr.mxu0 0.0
  %1511 = vmatpush1.msra.mxu0 %v1145
  %1512 = vmatprep.subr.mxu0 0.0
  %1513 = vmatpush1.msra.mxu0 %v1144
  %1514 = vmatprep.subr.mxu0 0.0
  %1515 = vmatpush1.msra.mxu0 %v1143
  %1516 = vmatprep.subr.mxu0 0.0
  %1517 = vmatpush1.msra.mxu0 %v1142
  %1518 = vmatprep.subr.mxu0 0.0
  %1519 = vmatpush1.msra.mxu0 %v1141
  %1520 = vmatprep.subr.mxu0 0.0
  %1521 = vmatpush1.msra.mxu0 %v1140
  %1522 = vmatprep.subr.mxu0 0.0
  %1523 = vmatpush1.msra.mxu0 %v1139
  %1524 = vmatprep.subr.mxu0 0.0
  %1525 = vmatpush1.msra.mxu0 %v1138
  %1526 = vmatprep.subr.mxu0 0.0
  %1527 = vmatpush1.msra.mxu0 %v1137
  %1528 = vmatprep.subr.mxu0 0.0
  %1529 = vmatpush1.msra.mxu0 %v1136
  %1530 = vmatprep.subr.mxu0 0.0
  %1531 = vmatpush1.msra.mxu0 %v1135
  %1532 = vmatprep.subr.mxu0 0.0
  %1533 = vmatpush1.msra.mxu0 %v1134
  %1534 = vmatprep.subr.mxu0 0.0
  %1535 = vmatpush1.msra.mxu0 %v1133
  %1536 = vmatprep.subr.mxu0 0.0
  %1537 = vmatpush1.msra.mxu0 %v1132
  %1538 = vmatprep.subr.mxu0 0.0
  %1539 = vmatpush1.msra.mxu0 %v1131
  %1540 = vmatprep.subr.mxu0 0.0
  %1541 = vmatpush2.msra.mxu0 %v1162
  %1542 = vmatprep.subr.mxu0 0.0
  %1543 = vmatpush2.msra.mxu0 %v1161
  %1544 = vmatprep.subr.mxu0 0.0
  %1545 = vmatpush2.msra.mxu0 %v1160
  %1546 = vmatprep.subr.mxu0 0.0
  %1547 = vmatpush2.msra.mxu0 %v1159
  %1548 = vmatprep.subr.mxu0 0.0
  %1549 = vmatpush2.msra.mxu0 %v1158
  %1550 = vmatprep.subr.mxu0 0.0
  %1551 = vmatpush2.msra.mxu0 %v1157
  %1552 = vmatprep.subr.mxu0 0.0
  %1553 = vmatpush2.msra.mxu0 %v1156
  %1554 = vmatprep.subr.mxu0 0.0
  %1555 = vmatpush2.msra.mxu0 %v1155
  %1556 = vmatprep.subr.mxu0 0.0
  %1557 = vmatpush2.msra.mxu0 %v1154
  %1558 = vmatprep.subr.mxu0 0.0
  %1559 = vmatpush2.msra.mxu0 %v1153
  %1560 = vmatprep.subr.mxu0 0.0
  %1561 = vmatpush2.msra.mxu0 %v1152
  %1562 = vmatprep.subr.mxu0 0.0
  %1563 = vmatpush2.msra.mxu0 %v1151
  %1564 = vmatprep.subr.mxu0 0.0
  %1565 = vmatpush2.msra.mxu0 %v1150
  %1566 = vmatprep.subr.mxu0 0.0
  %1567 = vmatpush2.msra.mxu0 %v1149
  %1568 = vmatprep.subr.mxu0 0.0
  %1569 = vmatpush2.msra.mxu0 %v1148
  %1570 = vmatprep.subr.mxu0 0.0
  %1571 = vmatpush2.msra.mxu0 %v1147
  %1572 = vmatprep.mubr.f32.mxu0 %v843
  %1573 = vmatmul.mubr.f32.gmra.mxu0 %v841
  %v1574 = vpop.f32.mrf.mxu0
  %v1575 = vadd.f32 %v1500, %v1574
  %v1576 = vpop.f32.mrf.mxu0
  %1577 = vmatprep.mubr.f32.mxu0 %v849
  %1578 = vmatmul.mubr.f32.gmra.mxu0 %v847
  %v1579 = vpop.f32.mrf.mxu0
  %v1580 = vadd.f32 %v1505, %v1579
  %v1581 = vpop.f32.mrf.mxu0
  %1582 = vdwg.mxu0
  %1583 = vmatprep.subr.mxu0 0.0
  %1584 = vmatpush1.msra.mxu0 %v1178
  %1585 = vmatprep.subr.mxu0 0.0
  %1586 = vmatpush1.msra.mxu0 %v1177
  %1587 = vmatprep.subr.mxu0 0.0
  %1588 = vmatpush1.msra.mxu0 %v1176
  %1589 = vmatprep.subr.mxu0 0.0
  %1590 = vmatpush1.msra.mxu0 %v1175
  %1591 = vmatprep.subr.mxu0 0.0
  %1592 = vmatpush1.msra.mxu0 %v1174
  %1593 = vmatprep.subr.mxu0 0.0
  %1594 = vmatpush1.msra.mxu0 %v1173
  %1595 = vmatprep.subr.mxu0 0.0
  %1596 = vmatpush1.msra.mxu0 %v1172
  %1597 = vmatprep.subr.mxu0 0.0
  %1598 = vmatpush1.msra.mxu0 %v1171
  %1599 = vmatprep.subr.mxu0 0.0
  %1600 = vmatpush1.msra.mxu0 %v1170
  %1601 = vmatprep.subr.mxu0 0.0
  %1602 = vmatpush1.msra.mxu0 %v1169
  %1603 = vmatprep.subr.mxu0 0.0
  %1604 = vmatpush1.msra.mxu0 %v1168
  %1605 = vmatprep.subr.mxu0 0.0
  %1606 = vmatpush1.msra.mxu0 %v1167
  %1607 = vmatprep.subr.mxu0 0.0
  %1608 = vmatpush1.msra.mxu0 %v1166
  %1609 = vmatprep.subr.mxu0 0.0
  %1610 = vmatpush1.msra.mxu0 %v1165
  %1611 = vmatprep.subr.mxu0 0.0
  %1612 = vmatpush1.msra.mxu0 %v1164
  %1613 = vmatprep.subr.mxu0 0.0
  %1614 = vmatpush1.msra.mxu0 %v1163
  %1615 = vmatprep.subr.mxu0 0.0
  %1616 = vmatpush2.msra.mxu0 %v1194
  %1617 = vmatprep.subr.mxu0 0.0
  %1618 = vmatpush2.msra.mxu0 %v1193
  %1619 = vmatprep.subr.mxu0 0.0
  %1620 = vmatpush2.msra.mxu0 %v1192
  %1621 = vmatprep.subr.mxu0 0.0
  %1622 = vmatpush2.msra.mxu0 %v1191
  %1623 = vmatprep.subr.mxu0 0.0
  %1624 = vmatpush2.msra.mxu0 %v1190
  %1625 = vmatprep.subr.mxu0 0.0
  %1626 = vmatpush2.msra.mxu0 %v1189
  %1627 = vmatprep.subr.mxu0 0.0
  %1628 = vmatpush2.msra.mxu0 %v1188
  %1629 = vmatprep.subr.mxu0 0.0
  %1630 = vmatpush2.msra.mxu0 %v1187
  %1631 = vmatprep.subr.mxu0 0.0
  %1632 = vmatpush2.msra.mxu0 %v1186
  %1633 = vmatprep.subr.mxu0 0.0
  %1634 = vmatpush2.msra.mxu0 %v1185
  %1635 = vmatprep.subr.mxu0 0.0
  %1636 = vmatpush2.msra.mxu0 %v1184
  %1637 = vmatprep.subr.mxu0 0.0
  %1638 = vmatpush2.msra.mxu0 %v1183
  %1639 = vmatprep.subr.mxu0 0.0
  %1640 = vmatpush2.msra.mxu0 %v1182
  %1641 = vmatprep.subr.mxu0 0.0
  %1642 = vmatpush2.msra.mxu0 %v1181
  %1643 = vmatprep.subr.mxu0 0.0
  %1644 = vmatpush2.msra.mxu0 %v1180
  %1645 = vmatprep.subr.mxu0 0.0
  %1646 = vmatpush2.msra.mxu0 %v1179
  %1647 = vmatprep.mubr.f32.mxu0 %v920
  %1648 = vmatmul.mubr.f32.gmra.mxu0 %v918
  %v1649 = vpop.f32.mrf.mxu0
  %v1650 = vadd.f32 %v1575, %v1649
  %v1651 = vpop.f32.mrf.mxu0
  %1652 = vmatprep.mubr.f32.mxu0 %v926
  %1653 = vmatmul.mubr.f32.gmra.mxu0 %v924
  %v1654 = vpop.f32.mrf.mxu0
  %v1655 = vadd.f32 %v1580, %v1654
  %v1656 = vpop.f32.mrf.mxu0
  %1657 = vdwg.mxu0
  %1658 = vmatprep.subr.mxu0 0.0
  %1659 = vmatpush1.msra.mxu0 0.0
  %1660 = vmatprep.subr.mxu0 0.0
  %1661 = vmatpush1.msra.mxu0 0.0
  %1662 = vmatprep.subr.mxu0 0.0
  %1663 = vmatpush1.msra.mxu0 0.0
  %1664 = vmatprep.subr.mxu0 0.0
  %1665 = vmatpush1.msra.mxu0 0.0
  %1666 = vmatprep.subr.mxu0 0.0
  %1667 = vmatpush1.msra.mxu0 0.0
  %1668 = vmatprep.subr.mxu0 0.0
  %1669 = vmatpush1.msra.mxu0 0.0
  %1670 = vmatprep.subr.mxu0 0.0
  %1671 = vmatpush1.msra.mxu0 0.0
  %1672 = vmatprep.subr.mxu0 0.0
  %1673 = vmatpush1.msra.mxu0 0.0
  %1674 = vmatprep.subr.mxu0 0.0
  %1675 = vmatpush1.msra.mxu0 0.0
  %1676 = vmatprep.subr.mxu0 0.0
  %1677 = vmatpush1.msra.mxu0 0.0
  %1678 = vmatprep.subr.mxu0 0.0
  %1679 = vmatpush1.msra.mxu0 0.0
  %1680 = vmatprep.subr.mxu0 0.0
  %1681 = vmatpush1.msra.mxu0 0.0
  %1682 = vmatprep.subr.mxu0 0.0
  %1683 = vmatpush1.msra.mxu0 %v1198
  %1684 = vmatprep.subr.mxu0 0.0
  %1685 = vmatpush1.msra.mxu0 %v1197
  %1686 = vmatprep.subr.mxu0 0.0
  %1687 = vmatpush1.msra.mxu0 %v1196
  %1688 = vmatprep.subr.mxu0 0.0
  %1689 = vmatpush1.msra.mxu0 %v1195
  %1690 = vmatprep.subr.mxu0 0.0
  %1691 = vmatpush2.msra.mxu0 0.0
  %1692 = vmatprep.subr.mxu0 0.0
  %1693 = vmatpush2.msra.mxu0 0.0
  %1694 = vmatprep.subr.mxu0 0.0
  %1695 = vmatpush2.msra.mxu0 0.0
  %1696 = vmatprep.subr.mxu0 0.0
  %1697 = vmatpush2.msra.mxu0 0.0
  %1698 = vmatprep.subr.mxu0 0.0
  %1699 = vmatpush2.msra.mxu0 0.0
  %1700 = vmatprep.subr.mxu0 0.0
  %1701 = vmatpush2.msra.mxu0 0.0
  %1702 = vmatprep.subr.mxu0 0.0
  %1703 = vmatpush2.msra.mxu0 0.0
  %1704 = vmatprep.subr.mxu0 0.0
  %1705 = vmatpush2.msra.mxu0 0.0
  %1706 = vmatprep.subr.mxu0 0.0
  %1707 = vmatpush2.msra.mxu0 0.0
  %1708 = vmatprep.subr.mxu0 0.0
  %1709 = vmatpush2.msra.mxu0 0.0
  %1710 = vmatprep.subr.mxu0 0.0
  %1711 = vmatpush2.msra.mxu0 0.0
  %1712 = vmatprep.subr.mxu0 0.0
  %1713 = vmatpush2.msra.mxu0 0.0
  %1714 = vmatprep.subr.mxu0 0.0
  %1715 = vmatpush2.msra.mxu0 0.0
  %1716 = vmatprep.subr.mxu0 0.0
  %1717 = vmatpush2.msra.mxu0 0.0
  %1718 = vmatprep.subr.mxu0 0.0
  %1719 = vmatpush2.msra.mxu0 0.0
  %1720 = vmatprep.subr.mxu0 0.0
  %1721 = vmatpush2.msra.mxu0 0.0
  %1722 = vmatprep.mubr.f32.mxu0 0.0
  %1723 = vmatmul.mubr.f32.gmra.mxu0 %v1203
  %v1724 = vpop.f32.mrf.mxu0
  %v1725 = vadd.f32 %v1650, %v1724
  %v1726 = vpop.f32.mrf.mxu0
  %1727 = vmatprep.mubr.f32.mxu0 0.0
  %1728 = vmatmul.mubr.f32.gmra.mxu0 %v1206
  %v1729 = vpop.f32.mrf.mxu0
  %v1730 = vadd.f32 %v1655, %v1729
  %v1731 = vpop.f32.mrf.mxu0
  %1732 = vdwg.mxu0
  %1733 = vst [vmem:[%s5] sm:$0xff] %v1725
  %1734 = vst [vmem:[%s5 + $0x8] sm:$0xff] %v1730
  // Predicated region
  $region22: #{cat_seg_predictor_forward.5} parent=0 // pred_check
    _
  $region23: #{cat_seg_predictor_forward.5} parent=0 // pred_check_branch
    %1736 = sbr.rel (0) target = $region25
  $region24: #{cat_seg_predictor_forward.5} parent=0 // pred_region
    _
  $region25: #{cat_seg_predictor_forward.5} parent=0 // pred_fallthru
    _
  // Predicated region
  $region26: #{cat_seg_predictor_forward.5} parent=0 // pred_check
    _
  $region27: #{cat_seg_predictor_forward.5} parent=0 // pred_check_branch
    %1738 = sbr.rel (0) target = $region29
  $region28: #{cat_seg_predictor_forward.5} parent=0 // pred_region
    _
  $region29: #{cat_seg_predictor_forward.5} parent=0 // pred_fallthru
    _

</llo_original>
